<compile_context>
chip_gen: v7x
topology: tpu7x:2x2x1
jax: 0.10.0
libtpu: 0.0.40
codegen_flags: <defaults>
</compile_context>

<pallas_src>
import math
import numpy as np
import jax
import jax.numpy as jnp
from jax import lax
from jax.experimental import pallas as pl
from jax.experimental.pallas import tpu as pltpu

PI = math.pi

# -------------------- model hyper-parameters (small, module-consistent) --------------
HIDDEN = 32          # hidden_channels
NFILT = 32           # num_filters
NINTER = 2           # num_interactions
NGAUSS = 16          # num_gaussians
CUTOFF = 4.0
HIDDEN2 = HIDDEN // 2

N_ATOMS = 8
N_EDGES = 12
N_GRAPHS = 2
N_GRAPHS_PAD = 8     # sublane-aligned padded graph count for the output tile
OUT_LANES = 128      # lane-dense output width
FPAD = 128           # per-interaction filter path padded to a full vreg lane width

GAUSS_COEFF = -0.5 / (CUTOFF / (NGAUSS - 1)) ** 2   # -0.5 / (offset[1]-offset[0])^2

# Static guards: one-hot gather/scatter puts nodes/edges/graphs on lanes.
assert N_ATOMS <= 128 and N_EDGES <= 128 and N_GRAPHS <= N_GRAPHS_PAD <= 128
# (Runtime requirement: batch ids must be < N_GRAPHS_PAD and z < 100.)


def _round8(n):
    return ((n + 7) // 8) * 8


EMB_ROWS = _round8(100)                      # embedding table rows, sublane-padded


# -------------------- static slab layouts (row offsets are Python ints) --------------
def _build_w_layout():
    layout, row = {}, 0

    def add(name, r, c):
        nonlocal row
        layout[name] = (row, r, c)
        row += _round8(r)

    add("emb", EMB_ROWS, HIDDEN)
    add("mw1", NGAUSS, NINTER * FPAD)
    add("mw2", NINTER * FPAD, NINTER * FPAD)
    for k in range(NINTER):
        add(f"cw1_{k}", HIDDEN, FPAD)
    for k in range(NINTER):
        add(f"cw2_{k}", FPAD, HIDDEN)
    for k in range(NINTER):
        add(f"lw_{k}", HIDDEN, HIDDEN)
    for k in range(NINTER - 1):
        add(f"lwcw1_{k}", HIDDEN, FPAD)       # fused blk_w[k] @ cw1_pad[k+1]
    add("hw1", HIDDEN, HIDDEN2)
    add("hw2", HIDDEN2, OUT_LANES)
    return layout, row


W_LAYOUT, W_ROWS = _build_w_layout()
W_COLS = NINTER * FPAD


def _build_b_layout():
    layout, row = {}, 0

    def add(name, c):
        nonlocal row
        layout[name] = (row, 1, c)
        row += 1

    add("mb1", NINTER * FPAD)
    add("mb2", NINTER * FPAD)
    for k in range(NINTER):
        add(f"cb2_{k}", HIDDEN)
    for k in range(NINTER):
        add(f"lb_{k}", HIDDEN)
    for k in range(NINTER - 1):
        add(f"lbcw1_{k}", FPAD)               # fused blk_b[k] @ cw1_pad[k+1]
    add("hb1", HIDDEN2)
    add("hb2", OUT_LANES)
    return layout, _round8(row)


B_LAYOUT, B_ROWS = _build_b_layout()

GEO_POS_ROW = 0
GEO_OFF_ROW = _round8(N_ATOMS)
GEO_CELL_ROW = GEO_OFF_ROW + _round8(N_EDGES)
GEO_ROWS = GEO_CELL_ROW + 8

IDX_COL_ROWS = max(_round8(N_ATOMS), _round8(N_EDGES))
IDX_LANES = max(IDX_COL_ROWS, 8)
IDX_ROW0 = IDX_COL_ROWS
IDX_ROWS = IDX_COL_ROWS + 2


# -------------------- small math helpers --------------------
def shifted_softplus(x):
    # softplus(x) - log(2), numerically stable, kept in f32 (v5e-friendly VPU/EUP).
    return jnp.maximum(x, 0.0) + jnp.log(1.0 + jnp.exp(-jnp.abs(x))) - math.log(2.0)


def fdot(a, b):
    # f32 operands, f32 accumulation (bf16 operand casts removed: unsupported by the
    # evaluation runtime's dot executor; negligible FLOP cost at this size).
    return jnp.dot(a, b, preferred_element_type=jnp.float32)


def _w(ref, name):
    r0, nr, nc = W_LAYOUT[name]
    return ref[r0:r0 + nr, 0:nc]


def _b(ref, name):
    r0, nr, nc = B_LAYOUT[name]
    return ref[r0:r0 + nr, 0:nc]


# -------------------- Pallas kernel --------------------
def schnet_kernel(w_ref, b_ref, geo_ref, idx_ref, out_ref):
    f32 = jnp.float32

    # ---- one-hot gather / scatter matrices built in-kernel from int32 indices ----
    z_col = idx_ref[0:N_ATOMS, 0:1]                                    # [N,1]
    src_col = idx_ref[0:N_EDGES, 1:2]                                  # [E,1]
    tgt_col = idx_ref[0:N_EDGES, 2:3]                                  # [E,1]
    tgt_row = idx_ref[IDX_ROW0:IDX_ROW0 + 1, 0:N_EDGES]                # [1,E]
    bat_row = idx_ref[IDX_ROW0 + 1:IDX_ROW0 + 2, 0:N_ATOMS]            # [1,N]

    z_oh = (z_col == lax.broadcasted_iota(jnp.int32, (N_ATOMS, EMB_ROWS), 1)).astype(f32)
    src_oh = (src_col == lax.broadcasted_iota(jnp.int32, (N_EDGES, N_ATOMS), 1)).astype(f32)
    tgt_oh = (tgt_col == lax.broadcasted_iota(jnp.int32, (N_EDGES, N_ATOMS), 1)).astype(f32)
    tgtT_oh = (lax.broadcasted_iota(jnp.int32, (N_ATOMS, N_EDGES), 0) == tgt_row).astype(f32)
    batT_oh = (lax.broadcasted_iota(jnp.int32, (N_GRAPHS_PAD, N_ATOMS), 0) == bat_row).astype(f32)

    # ---- PBC distance, Gaussian smearing, cosine cutoff (all in-kernel) ----
    # TODO(synk): `get_distance` is external to the module; standard PBC convention
    # d = ||pos[src] - pos[tgt] + offset @ cell|| used.  Edges past CUTOFF are not
    # masked, matching PyG's CFConv formula used by the module.
    pos = geo_ref[GEO_POS_ROW:GEO_POS_ROW + N_ATOMS, 0:3]
    offs = geo_ref[GEO_OFF_ROW:GEO_OFF_ROW + N_EDGES, 0:3]
    cell = geo_ref[GEO_CELL_ROW:GEO_CELL_ROW + 3, 0:3]
    dvec = fdot(src_oh - tgt_oh, pos) + fdot(offs, cell)               # [E,3]
    ew = jnp.sqrt(jnp.sum(dvec * dvec, axis=-1, keepdims=True))        # [E,1]

    goff = lax.broadcasted_iota(jnp.int32, (1, NGAUSS), 1).astype(f32) * (CUTOFF / (NGAUSS - 1))
    attr = jnp.exp(GAUSS_COEFF * (ew - goff) ** 2)                     # [E,G]
    C = 0.5 * (jnp.cos(ew * (PI / CUTOFF)) + 1.0)                      # [E,1]

    # ---- hoisted filter-generating MLP for ALL interactions (loop-invariant) ----
    t = shifted_softplus(fdot(attr, _w(w_ref, "mw1")) + _b(b_ref, "mb1"))   # [E, K*FP]
    W_all = (fdot(t, _w(w_ref, "mw2")) + _b(b_ref, "mb2")) * C              # [E, K*FP]

    # ---- embedding lookup (VMEM-resident table, one-hot matmul) ----
    h = fdot(z_oh, _w(w_ref, "emb"))                                        # [N,H]

    # ---- interaction chain (statically unrolled; chain-shortened residual) ----
    x1 = fdot(h, _w(w_ref, "cw1_0"))                                        # [N,FP]
    for k in range(NINTER):
        Wk = W_all[:, k * FPAD:(k + 1) * FPAD]                              # vreg-aligned
        xj = fdot(src_oh, x1)                                               # gather x[src]
        agg = fdot(tgtT_oh, xj * Wk)                                        # scatter-add
        s = shifted_softplus(fdot(agg, _w(w_ref, f"cw2_{k}")) + _b(b_ref, f"cb2_{k}"))
        if k + 1 < NINTER:
            # x1_{k+1} = h_k @ cw1_{k+1} rewritten so only s@(lw_k@cw1_{k+1}) sits on the
            # dependent chain; `h` here is still h_{k-1} (ready since last iteration).
            x1 = (fdot(h, _w(w_ref, f"cw1_{k + 1}"))
                  + fdot(s, _w(w_ref, f"lwcw1_{k}"))
                  + _b(b_ref, f"lbcw1_{k}"))
        h = h + fdot(s, _w(w_ref, f"lw_{k}")) + _b(b_ref, f"lb_{k}")

    # ---- readout head; lane-dense (8,128) f32 output tile ----
    y = shifted_softplus(fdot(h, _w(w_ref, "hw1")) + _b(b_ref, "hb1"))      # [N,H/2]
    y = fdot(y, _w(w_ref, "hw2")) + _b(b_ref, "hb2")                        # [N,128]
    out_ref[...] = fdot(batT_oh, y)                                         # [8,128]


def schnet_pallas(wslab, bslab, geo, idx):
    vmem = pl.BlockSpec(memory_space=pltpu.MemorySpace.VMEM)
    return pl.pallas_call(
        schnet_kernel,
        out_shape=jax.ShapeDtypeStruct((N_GRAPHS_PAD, OUT_LANES), jnp.float32),
        in_specs=[vmem, vmem, vmem, vmem],
        out_specs=vmem,
    )(wslab, bslab, geo, idx)


# -------------------- parameter init (deterministic, in-script) --------------------
def xavier_uniform(key, fan_in, fan_out):
    a = math.sqrt(6.0 / (fan_in + fan_out))
    return jax.random.uniform(key, (fan_in, fan_out), jnp.float32, -a, a)


def init_params(key):
    keys = jax.random.split(key, 4 + NINTER * 5 + 2)
    it = iter(keys)
    p = {}
    p["embedding"] = jax.random.normal(next(it), (100, HIDDEN), jnp.float32)
    mw1, mw2, cw1, cw2, bw = [], [], [], [], []
    for _ in range(NINTER):
        mw1.append(xavier_uniform(next(it), NGAUSS, NFILT))
        mw2.append(xavier_uniform(next(it), NFILT, NFILT))
        cw1.append(xavier_uniform(next(it), HIDDEN, NFILT))
        cw2.append(xavier_uniform(next(it), NFILT, HIDDEN))
        bw.append(xavier_uniform(next(it), HIDDEN, HIDDEN))
    p["mlp_w1"] = jnp.stack(mw1)                                  # [K, G, F]
    p["mlp_b1"] = jnp.zeros((NINTER, 1, NFILT), jnp.float32)
    p["mlp_w2"] = jnp.stack(mw2)                                  # [K, F, F]
    p["mlp_b2"] = jnp.zeros((NINTER, 1, NFILT), jnp.float32)
    p["cf_w1"] = jnp.stack(cw1)                                   # [K, H, F]
    p["cf_w2"] = jnp.stack(cw2)                                   # [K, F, H]
    p["cf_b2"] = jnp.zeros((NINTER, 1, HIDDEN), jnp.float32)
    p["blk_w"] = jnp.stack(bw)                                    # [K, H, H]
    p["blk_b"] = jnp.zeros((NINTER, 1, HIDDEN), jnp.float32)
    p["head_w1"] = xavier_uniform(next(it), HIDDEN, HIDDEN2)      # [H, H/2]
    p["head_b1"] = jnp.zeros((1, HIDDEN2), jnp.float32)
    p["head_w2"] = xavier_uniform(next(it), HIDDEN2, 1)           # [H/2, 1]
    p["head_b2"] = jnp.zeros((1, 1), jnp.float32)
    return p


def pack_params(params):
    """One-time packing of all weights / biases into two lane-aligned f32 slabs."""
    p = {k: np.asarray(v, np.float32) for k, v in params.items()}

    cw1p = [np.pad(p["cf_w1"][k], ((0, 0), (0, FPAD - NFILT))) for k in range(NINTER)]
    cw2p = [np.pad(p["cf_w2"][k], ((0, FPAD - NFILT), (0, 0))) for k in range(NINTER)]

    wslab = np.zeros((W_ROWS, W_COLS), np.float32)

    def putw(name, mat):
        r0, nr, nc = W_LAYOUT[name]
        assert mat.shape[0] <= nr and mat.shape[1] <= nc, (name, mat.shape)
        wslab[r0:r0 + mat.shape[0], :mat.shape[1]] = mat

    putw("emb", p["embedding"])
    putw("mw1", np.concatenate(
        [np.pad(p["mlp_w1"][k], ((0, 0), (0, FPAD - NFILT))) for k in range(NINTER)], axis=1))
    mw2 = np.zeros((NINTER * FPAD, NINTER * FPAD), np.float32)
    for k in range(NINTER):
        mw2[k * FPAD:k * FPAD + NFILT, k * FPAD:k * FPAD + NFILT] = p["mlp_w2"][k]
    putw("mw2", mw2)
    for k in range(NINTER):
        putw(f"cw1_{k}", cw1p[k])
        putw(f"cw2_{k}", cw2p[k])
        putw(f"lw_{k}", p["blk_w"][k])
    for k in range(NINTER - 1):
        putw(f"lwcw1_{k}", p["blk_w"][k] @ cw1p[k + 1])      # fused residual->lin1 weight
    putw("hw1", p["head_w1"])
    putw("hw2", np.pad(p["head_w2"], ((0, 0), (0, OUT_LANES - 1))))

    bslab = np.zeros((B_ROWS, W_COLS), np.float32)

    def putb(name, vec):
        r0, _, nc = B_LAYOUT[name]
        vec = np.asarray(vec, np.float32).reshape(1, -1)
        assert vec.shape[1] <= nc, (name, vec.shape)
        bslab[r0:r0 + 1, :vec.shape[1]] = vec

    putb("mb1", np.concatenate(
        [np.pad(p["mlp_b1"][k], ((0, 0), (0, FPAD - NFILT))) for k in range(NINTER)], axis=1))
    putb("mb2", np.concatenate(
        [np.pad(p["mlp_b2"][k], ((0, 0), (0, FPAD - NFILT))) for k in range(NINTER)], axis=1))
    for k in range(NINTER):
        putb(f"cb2_{k}", p["cf_b2"][k])
        putb(f"lb_{k}", p["blk_b"][k])
    for k in range(NINTER - 1):
        putb(f"lbcw1_{k}", p["blk_b"][k] @ cw1p[k + 1])
    putb("hb1", p["head_b1"])
    putb("hb2", np.pad(p["head_b2"], ((0, 0), (0, OUT_LANES - 1))))

    return {"wslab": jnp.asarray(wslab), "bslab": jnp.asarray(bslab)}


# -------------------- full forward wrapper (minimal glue; hot path is the kernel) ----
@jax.jit
def schnet_forward(z, pos, edge_index, offset, cell, batch, kp):
    # Per-call glue is only the packing of geometry + indices into two small slabs.
    geo = jnp.concatenate([
        jnp.pad(pos.astype(jnp.float32), ((0, GEO_OFF_ROW - GEO_POS_ROW - N_ATOMS), (0, 0))),
        jnp.pad(offset.astype(jnp.float32), ((0, GEO_CELL_ROW - GEO_OFF_ROW - N_EDGES), (0, 0))),
        jnp.pad(cell.astype(jnp.float32), ((0, GEO_ROWS - GEO_CELL_ROW - 3), (0, 0))),
    ], axis=0)                                                        # [GEO_ROWS, 3]

    zi = z.astype(jnp.int32)
    si = edge_index[0].astype(jnp.int32)
    ti = edge_index[1].astype(jnp.int32)
    bi = batch.astype(jnp.int32)
    col = jnp.stack([
        jnp.pad(zi, (0, IDX_COL_ROWS - N_ATOMS)),
        jnp.pad(si, (0, IDX_COL_ROWS - N_EDGES)),
        jnp.pad(ti, (0, IDX_COL_ROWS - N_EDGES)),
        jnp.pad(bi, (0, IDX_COL_ROWS - N_ATOMS)),
    ], axis=1)                                                        # [IDX_COL_ROWS, 4]
    col = jnp.pad(col, ((0, 0), (0, IDX_LANES - 4)))                  # [IDX_COL_ROWS, 16]
    row = jnp.stack([
        jnp.pad(ti, (0, IDX_LANES - N_EDGES)),
        jnp.pad(bi, (0, IDX_LANES - N_ATOMS)),
    ], axis=0)                                                        # [2, 16]
    idx = jnp.concatenate([col, row], axis=0)                         # [IDX_ROWS, 16]

    out_full = schnet_pallas(kp["wslab"], kp["bslab"], geo, idx)
    return out_full[:N_GRAPHS, :1]                                    # [B, 1] energies


# -------------------- pure-JAX reference (test harness only) --------------------
def schnet_ref(z, pos, edge_index, offset, cell, batch, params):
    h = params["embedding"][z]
    src_idx, tgt_idx = edge_index[0], edge_index[1]
    dvec = pos[src_idx] - pos[tgt_idx] + offset @ cell
    ew = jnp.sqrt(jnp.sum(dvec * dvec, axis=-1))[:, None]
    goff = jnp.linspace(0.0, CUTOFF, NGAUSS, dtype=jnp.float32)[None, :]
    attr = jnp.exp(GAUSS_COEFF * (ew - goff) ** 2)
    C = 0.5 * (jnp.cos(ew * (PI / CUTOFF)) + 1.0)
    for k in range(NINTER):
        t = shifted_softplus(attr @ params["mlp_w1"][k] + params["mlp_b1"][k])
        W = (t @ params["mlp_w2"][k] + params["mlp_b2"][k]) * C
        x1 = h @ params["cf_w1"][k]
        msg = x1[src_idx] * W
        agg = jax.ops.segment_sum(msg, tgt_idx, num_segments=N_ATOMS)
        x2 = agg @ params["cf_w2"][k] + params["cf_b2"][k]
        h = h + shifted_softplus(x2) @ params["blk_w"][k] + params["blk_b"][k]
    y = shifted_softplus(h @ params["head_w1"] + params["head_b1"])
    y = y @ params["head_w2"] + params["head_b2"]
    return jax.ops.segment_sum(y, batch, num_segments=N_GRAPHS)


if __name__ == "__main__":
    key = jax.random.PRNGKey(0)
    kz, kpos, kparam = jax.random.split(key, 3)

    params = init_params(kparam)
    kp = pack_params(params)          # one-time weight packing, outside the hot path

    # two graphs of 4 atoms each
    z = jax.random.randint(kz, (N_ATOMS,), 1, 20)                         # atomic numbers
    pos = jax.random.uniform(kpos, (N_ATOMS, 3), jnp.float32, 0.0, 3.0)
    batch = jnp.array([0, 0, 0, 0, 1, 1, 1, 1], dtype=jnp.int32)
    # chain edges within each graph (bidirectional)
    e0 = [(0, 1), (1, 0), (1, 2), (2, 1), (2, 3), (3, 2)]
    edges = e0 + [(a + 4, b + 4) for (a, b) in e0]
    edge_index = jnp.array(edges, dtype=jnp.int32).T                      # [2, E]
    offset = jnp.zeros((N_EDGES, 3), jnp.float32)                         # PBC image offsets
    cell = 5.0 * jnp.eye(3, dtype=jnp.float32)

    # TODO(synk): calc_force (autograd of energy w.r.t. pos through the kernel) not
    # implemented; only the energy forward pass is produced.  dipole / atomref /
    # mean-std branches use the module defaults (disabled).
    out = schnet_forward(z, pos, edge_index, offset, cell, batch, kp)
    out = jax.block_until_ready(out)

    ref = schnet_ref(z, pos, edge_index, offset, cell, batch, params)
    np.testing.assert_allclose(np.asarray(out), np.asarray(ref), rtol=1e-3, atol=1e-3)
    print("KERNEL_OK")
</pallas_src>

<mosaic_0001>
module attributes {stable_mosaic.version = 11 : i64} {
  func.func @schnet_kernel(%arg0: memref<840x256xf32, #tpu.memory_space<vmem>>, %arg1: memref<16x256xf32, #tpu.memory_space<vmem>>, %arg2: memref<32x3xf32, #tpu.memory_space<vmem>>, %arg3: memref<18x16xi32, #tpu.memory_space<vmem>>, %arg4: memref<8x128xf32, #tpu.memory_space<vmem>>) attributes {dimension_semantics = [], scalar_prefetch = 0 : i64, scratch_operands = 0 : i64, tpu.core_type = #tpu.core_type<tc>} {
    %c0 = arith.constant 0 : index
    %c0_0 = arith.constant 0 : index
    %0 = vector.load %arg3[%c0, %c0_0] : memref<18x16xi32, #tpu.memory_space<vmem>>, vector<8x1xi32>
    %c0_1 = arith.constant 0 : index
    %c1 = arith.constant 1 : index
    %1 = vector.load %arg3[%c0_1, %c1] : memref<18x16xi32, #tpu.memory_space<vmem>>, vector<12x1xi32>
    %c0_2 = arith.constant 0 : index
    %c2 = arith.constant 2 : index
    %2 = vector.load %arg3[%c0_2, %c2] : memref<18x16xi32, #tpu.memory_space<vmem>>, vector<12x1xi32>
    %c16 = arith.constant 16 : index
    %c0_3 = arith.constant 0 : index
    %3 = vector.load %arg3[%c16, %c0_3] : memref<18x16xi32, #tpu.memory_space<vmem>>, vector<1x12xi32>
    %c17 = arith.constant 17 : index
    %c0_4 = arith.constant 0 : index
    %4 = vector.load %arg3[%c17, %c0_4] : memref<18x16xi32, #tpu.memory_space<vmem>>, vector<1x8xi32>
    %5 = tpu.iota {dimensions = array<i32: 1>} : vector<8x104xi32>
    %6 = vector.broadcast %0 : vector<8x1xi32> to vector<8x104xi32>
    %7 = arith.cmpi eq, %6, %5 : vector<8x104xi32>
    %8 = arith.extui %7 : vector<8x104xi1> to vector<8x104xi32>
    %9 = arith.sitofp %8 : vector<8x104xi32> to vector<8x104xf32>
    %10 = tpu.iota {dimensions = array<i32: 1>} : vector<12x8xi32>
    %11 = vector.broadcast %1 : vector<12x1xi32> to vector<12x8xi32>
    %12 = arith.cmpi eq, %11, %10 : vector<12x8xi32>
    %13 = arith.extui %12 : vector<12x8xi1> to vector<12x8xi32>
    %14 = arith.sitofp %13 : vector<12x8xi32> to vector<12x8xf32>
    %15 = tpu.iota {dimensions = array<i32: 1>} : vector<12x8xi32>
    %16 = vector.broadcast %2 : vector<12x1xi32> to vector<12x8xi32>
    %17 = arith.cmpi eq, %16, %15 : vector<12x8xi32>
    %18 = arith.extui %17 : vector<12x8xi1> to vector<12x8xi32>
    %19 = arith.sitofp %18 : vector<12x8xi32> to vector<12x8xf32>
    %20 = tpu.iota {dimensions = array<i32: 0>} : vector<8x12xi32>
    %21 = vector.broadcast %3 : vector<1x12xi32> to vector<8x12xi32>
    %22 = arith.cmpi eq, %20, %21 : vector<8x12xi32>
    %23 = arith.extui %22 : vector<8x12xi1> to vector<8x12xi32>
    %24 = arith.sitofp %23 : vector<8x12xi32> to vector<8x12xf32>
    %25 = tpu.iota {dimensions = array<i32: 0>} : vector<8x8xi32>
    %26 = vector.broadcast %4 : vector<1x8xi32> to vector<8x8xi32>
    %27 = arith.cmpi eq, %25, %26 : vector<8x8xi32>
    %28 = arith.extui %27 : vector<8x8xi1> to vector<8x8xi32>
    %29 = arith.sitofp %28 : vector<8x8xi32> to vector<8x8xf32>
    %c0_5 = arith.constant 0 : index
    %c0_6 = arith.constant 0 : index
    %30 = vector.load %arg2[%c0_5, %c0_6] : memref<32x3xf32, #tpu.memory_space<vmem>>, vector<8x3xf32>
    %c8 = arith.constant 8 : index
    %c0_7 = arith.constant 0 : index
    %31 = vector.load %arg2[%c8, %c0_7] : memref<32x3xf32, #tpu.memory_space<vmem>>, vector<12x3xf32>
    %c24 = arith.constant 24 : index
    %c0_8 = arith.constant 0 : index
    %32 = vector.load %arg2[%c24, %c0_8] : memref<32x3xf32, #tpu.memory_space<vmem>>, vector<3x3xf32>
    %33 = arith.subf %14, %19 : vector<12x8xf32>
    %cst = arith.constant dense<0.000000e+00> : vector<12x3xf32>
    %34 = tpu.matmul %33, %30, %cst {dimension_numbers = #tpu.dot_dimension_numbers<[1], [0], [0], [1], [0, 0, 1, 1], [], []>} : vector<12x8xf32>, vector<8x3xf32>, vector<12x3xf32> -> vector<12x3xf32>
    %cst_9 = arith.constant dense<0.000000e+00> : vector<12x3xf32>
    %35 = tpu.matmul %31, %32, %cst_9 {dimension_numbers = #tpu.dot_dimension_numbers<[1], [0], [0], [1], [0, 0, 1, 1], [], []>} : vector<12x3xf32>, vector<3x3xf32>, vector<12x3xf32> -> vector<12x3xf32>
    %36 = arith.addf %34, %35 : vector<12x3xf32>
    %37 = arith.mulf %36, %36 : vector<12x3xf32>
    %cst_10 = arith.constant dense<0.000000e+00> : vector<12xf32>
    %38 = vector.multi_reduction <add>, %37, %cst_10 [1] : vector<12x3xf32> to vector<12xf32>
    %39 = vector.shape_cast %38 : vector<12xf32> to vector<12x1xf32>
    %40 = math.sqrt %39 : vector<12x1xf32>
    %41 = tpu.iota {dimensions = array<i32: 1>} : vector<1x16xi32>
    %42 = arith.sitofp %41 : vector<1x16xi32> to vector<1x16xf32>
    %cst_11 = arith.constant 0.266666681 : f32
    %43 = vector.broadcast %cst_11 : f32 to vector<1x16xf32>
    %44 = arith.mulf %42, %43 : vector<1x16xf32>
    %45 = vector.broadcast %40 : vector<12x1xf32> to vector<12x16xf32>
    %46 = vector.broadcast %44 : vector<1x16xf32> to vector<12x16xf32>
    %47 = arith.subf %45, %46 : vector<12x16xf32>
    %48 = arith.mulf %47, %47 : vector<12x16xf32>
    %cst_12 = arith.constant -7.031250e+00 : f32
    %49 = vector.broadcast %cst_12 : f32 to vector<12x16xf32>
    %50 = arith.mulf %49, %48 : vector<12x16xf32>
    %51 = math.exp %50 : vector<12x16xf32>
    %cst_13 = arith.constant 0.785398185 : f32
    %52 = vector.broadcast %cst_13 : f32 to vector<12x1xf32>
    %53 = arith.mulf %40, %52 : vector<12x1xf32>
    %54 = math.cos %53 : vector<12x1xf32>
    %cst_14 = arith.constant 1.000000e+00 : f32
    %55 = vector.broadcast %cst_14 : f32 to vector<12x1xf32>
    %56 = arith.addf %54, %55 : vector<12x1xf32>
    %cst_15 = arith.constant 5.000000e-01 : f32
    %57 = vector.broadcast %cst_15 : f32 to vector<12x1xf32>
    %58 = arith.mulf %57, %56 : vector<12x1xf32>
    %c104 = arith.constant 104 : index
    %c0_16 = arith.constant 0 : index
    %59 = vector.load %arg0[%c104, %c0_16] : memref<840x256xf32, #tpu.memory_space<vmem>>, vector<16x256xf32>
    %cst_17 = arith.constant dense<0.000000e+00> : vector<12x256xf32>
    %60 = tpu.matmul %51, %59, %cst_17 {dimension_numbers = #tpu.dot_dimension_numbers<[1], [0], [0], [1], [0, 0, 1, 1], [], []>} : vector<12x16xf32>, vector<16x256xf32>, vector<12x256xf32> -> vector<12x256xf32>
    %c0_18 = arith.constant 0 : index
    %c0_19 = arith.constant 0 : index
    %61 = vector.load %arg1[%c0_18, %c0_19] : memref<16x256xf32, #tpu.memory_space<vmem>>, vector<1x256xf32>
    %62 = vector.broadcast %61 : vector<1x256xf32> to vector<12x256xf32>
    %63 = arith.addf %60, %62 : vector<12x256xf32>
    %cst_20 = arith.constant 0.000000e+00 : f32
    %64 = vector.broadcast %cst_20 : f32 to vector<12x256xf32>
    %65 = arith.maximumf %63, %64 : vector<12x256xf32>
    %66 = math.absf %63 : vector<12x256xf32>
    %cst_21 = arith.constant 0.000000e+00 : f32
    %67 = vector.broadcast %cst_21 : f32 to vector<12x256xf32>
    %68 = arith.subf %67, %66 : vector<12x256xf32>
    %69 = math.exp %68 : vector<12x256xf32>
    %cst_22 = arith.constant 1.000000e+00 : f32
    %70 = vector.broadcast %cst_22 : f32 to vector<12x256xf32>
    %71 = arith.addf %70, %69 : vector<12x256xf32>
    %72 = math.log %71 : vector<12x256xf32>
    %73 = arith.addf %65, %72 : vector<12x256xf32>
    %cst_23 = arith.constant 0.693147182 : f32
    %74 = vector.broadcast %cst_23 : f32 to vector<12x256xf32>
    %75 = arith.subf %73, %74 : vector<12x256xf32>
    %c120 = arith.constant 120 : index
    %c0_24 = arith.constant 0 : index
    %76 = vector.load %arg0[%c120, %c0_24] : memref<840x256xf32, #tpu.memory_space<vmem>>, vector<256x256xf32>
    %cst_25 = arith.constant dense<0.000000e+00> : vector<12x256xf32>
    %77 = tpu.matmul %75, %76, %cst_25 {dimension_numbers = #tpu.dot_dimension_numbers<[1], [0], [0], [1], [0, 0, 1, 1], [], []>} : vector<12x256xf32>, vector<256x256xf32>, vector<12x256xf32> -> vector<12x256xf32>
    %c1_26 = arith.constant 1 : index
    %c0_27 = arith.constant 0 : index
    %78 = vector.load %arg1[%c1_26, %c0_27] : memref<16x256xf32, #tpu.memory_space<vmem>>, vector<1x256xf32>
    %79 = vector.broadcast %78 : vector<1x256xf32> to vector<12x256xf32>
    %80 = arith.addf %77, %79 : vector<12x256xf32>
    %81 = vector.broadcast %58 : vector<12x1xf32> to vector<12x256xf32>
    %82 = arith.mulf %80, %81 : vector<12x256xf32>
    %c0_28 = arith.constant 0 : index
    %c0_29 = arith.constant 0 : index
    %83 = vector.load %arg0[%c0_28, %c0_29] : memref<840x256xf32, #tpu.memory_space<vmem>>, vector<104x32xf32>
    %cst_30 = arith.constant dense<0.000000e+00> : vector<8x32xf32>
    %84 = tpu.matmul %9, %83, %cst_30 {dimension_numbers = #tpu.dot_dimension_numbers<[1], [0], [0], [1], [0, 0, 1, 1], [], []>} : vector<8x104xf32>, vector<104x32xf32>, vector<8x32xf32> -> vector<8x32xf32>
    %c376 = arith.constant 376 : index
    %c0_31 = arith.constant 0 : index
    %85 = vector.load %arg0[%c376, %c0_31] : memref<840x256xf32, #tpu.memory_space<vmem>>, vector<32x128xf32>
    %cst_32 = arith.constant dense<0.000000e+00> : vector<8x128xf32>
    %86 = tpu.matmul %84, %85, %cst_32 {dimension_numbers = #tpu.dot_dimension_numbers<[1], [0], [0], [1], [0, 0, 1, 1], [], []>} : vector<8x32xf32>, vector<32x128xf32>, vector<8x128xf32> -> vector<8x128xf32>
    %87 = vector.extract_strided_slice %82 {offsets = [0, 0], sizes = [12, 128], strides = [1, 1]} : vector<12x256xf32> to vector<12x128xf32>
    %cst_33 = arith.constant dense<0.000000e+00> : vector<12x128xf32>
    %88 = tpu.matmul %14, %86, %cst_33 {dimension_numbers = #tpu.dot_dimension_numbers<[1], [0], [0], [1], [0, 0, 1, 1], [], []>} : vector<12x8xf32>, vector<8x128xf32>, vector<12x128xf32> -> vector<12x128xf32>
    %89 = arith.mulf %88, %87 : vector<12x128xf32>
    %cst_34 = arith.constant dense<0.000000e+00> : vector<8x128xf32>
    %90 = tpu.matmul %24, %89, %cst_34 {dimension_numbers = #tpu.dot_dimension_numbers<[1], [0], [0], [1], [0, 0, 1, 1], [], []>} : vector<8x12xf32>, vector<12x128xf32>, vector<8x128xf32> -> vector<8x128xf32>
    %c440 = arith.constant 440 : index
    %c0_35 = arith.constant 0 : index
    %91 = vector.load %arg0[%c440, %c0_35] : memref<840x256xf32, #tpu.memory_space<vmem>>, vector<128x32xf32>
    %cst_36 = arith.constant dense<0.000000e+00> : vector<8x32xf32>
    %92 = tpu.matmul %90, %91, %cst_36 {dimension_numbers = #tpu.dot_dimension_numbers<[1], [0], [0], [1], [0, 0, 1, 1], [], []>} : vector<8x128xf32>, vector<128x32xf32>, vector<8x32xf32> -> vector<8x32xf32>
    %c2_37 = arith.constant 2 : index
    %c0_38 = arith.constant 0 : index
    %93 = vector.load %arg1[%c2_37, %c0_38] : memref<16x256xf32, #tpu.memory_space<vmem>>, vector<1x32xf32>
    %94 = vector.broadcast %93 : vector<1x32xf32> to vector<8x32xf32>
    %95 = arith.addf %92, %94 : vector<8x32xf32>
    %cst_39 = arith.constant 0.000000e+00 : f32
    %96 = vector.broadcast %cst_39 : f32 to vector<8x32xf32>
    %97 = arith.maximumf %95, %96 : vector<8x32xf32>
    %98 = math.absf %95 : vector<8x32xf32>
    %cst_40 = arith.constant 0.000000e+00 : f32
    %99 = vector.broadcast %cst_40 : f32 to vector<8x32xf32>
    %100 = arith.subf %99, %98 : vector<8x32xf32>
    %101 = math.exp %100 : vector<8x32xf32>
    %cst_41 = arith.constant 1.000000e+00 : f32
    %102 = vector.broadcast %cst_41 : f32 to vector<8x32xf32>
    %103 = arith.addf %102, %101 : vector<8x32xf32>
    %104 = math.log %103 : vector<8x32xf32>
    %105 = arith.addf %97, %104 : vector<8x32xf32>
    %cst_42 = arith.constant 0.693147182 : f32
    %106 = vector.broadcast %cst_42 : f32 to vector<8x32xf32>
    %107 = arith.subf %105, %106 : vector<8x32xf32>
    %c408 = arith.constant 408 : index
    %c0_43 = arith.constant 0 : index
    %108 = vector.load %arg0[%c408, %c0_43] : memref<840x256xf32, #tpu.memory_space<vmem>>, vector<32x128xf32>
    %cst_44 = arith.constant dense<0.000000e+00> : vector<8x128xf32>
    %109 = tpu.matmul %84, %108, %cst_44 {dimension_numbers = #tpu.dot_dimension_numbers<[1], [0], [0], [1], [0, 0, 1, 1], [], []>} : vector<8x32xf32>, vector<32x128xf32>, vector<8x128xf32> -> vector<8x128xf32>
    %c760 = arith.constant 760 : index
    %c0_45 = arith.constant 0 : index
    %110 = vector.load %arg0[%c760, %c0_45] : memref<840x256xf32, #tpu.memory_space<vmem>>, vector<32x128xf32>
    %cst_46 = arith.constant dense<0.000000e+00> : vector<8x128xf32>
    %111 = tpu.matmul %107, %110, %cst_46 {dimension_numbers = #tpu.dot_dimension_numbers<[1], [0], [0], [1], [0, 0, 1, 1], [], []>} : vector<8x32xf32>, vector<32x128xf32>, vector<8x128xf32> -> vector<8x128xf32>
    %112 = arith.addf %109, %111 : vector<8x128xf32>
    %c6 = arith.constant 6 : index
    %c0_47 = arith.constant 0 : index
    %113 = vector.load %arg1[%c6, %c0_47] : memref<16x256xf32, #tpu.memory_space<vmem>>, vector<1x128xf32>
    %114 = vector.broadcast %113 : vector<1x128xf32> to vector<8x128xf32>
    %115 = arith.addf %112, %114 : vector<8x128xf32>
    %c696 = arith.constant 696 : index
    %c0_48 = arith.constant 0 : index
    %116 = vector.load %arg0[%c696, %c0_48] : memref<840x256xf32, #tpu.memory_space<vmem>>, vector<32x32xf32>
    %cst_49 = arith.constant dense<0.000000e+00> : vector<8x32xf32>
    %117 = tpu.matmul %107, %116, %cst_49 {dimension_numbers = #tpu.dot_dimension_numbers<[1], [0], [0], [1], [0, 0, 1, 1], [], []>} : vector<8x32xf32>, vector<32x32xf32>, vector<8x32xf32> -> vector<8x32xf32>
    %118 = arith.addf %84, %117 : vector<8x32xf32>
    %c4 = arith.constant 4 : index
    %c0_50 = arith.constant 0 : index
    %119 = vector.load %arg1[%c4, %c0_50] : memref<16x256xf32, #tpu.memory_space<vmem>>, vector<1x32xf32>
    %120 = vector.broadcast %119 : vector<1x32xf32> to vector<8x32xf32>
    %121 = arith.addf %118, %120 : vector<8x32xf32>
    %122 = vector.extract_strided_slice %82 {offsets = [0, 128], sizes = [12, 128], strides = [1, 1]} : vector<12x256xf32> to vector<12x128xf32>
    %cst_51 = arith.constant dense<0.000000e+00> : vector<12x128xf32>
    %123 = tpu.matmul %14, %115, %cst_51 {dimension_numbers = #tpu.dot_dimension_numbers<[1], [0], [0], [1], [0, 0, 1, 1], [], []>} : vector<12x8xf32>, vector<8x128xf32>, vector<12x128xf32> -> vector<12x128xf32>
    %124 = arith.mulf %123, %122 : vector<12x128xf32>
    %cst_52 = arith.constant dense<0.000000e+00> : vector<8x128xf32>
    %125 = tpu.matmul %24, %124, %cst_52 {dimension_numbers = #tpu.dot_dimension_numbers<[1], [0], [0], [1], [0, 0, 1, 1], [], []>} : vector<8x12xf32>, vector<12x128xf32>, vector<8x128xf32> -> vector<8x128xf32>
    %c568 = arith.constant 568 : index
    %c0_53 = arith.constant 0 : index
    %126 = vector.load %arg0[%c568, %c0_53] : memref<840x256xf32, #tpu.memory_space<vmem>>, vector<128x32xf32>
    %cst_54 = arith.constant dense<0.000000e+00> : vector<8x32xf32>
    %127 = tpu.matmul %125, %126, %cst_54 {dimension_numbers = #tpu.dot_dimension_numbers<[1], [0], [0], [1], [0, 0, 1, 1], [], []>} : vector<8x128xf32>, vector<128x32xf32>, vector<8x32xf32> -> vector<8x32xf32>
    %c3 = arith.constant 3 : index
    %c0_55 = arith.constant 0 : index
    %128 = vector.load %arg1[%c3, %c0_55] : memref<16x256xf32, #tpu.memory_space<vmem>>, vector<1x32xf32>
    %129 = vector.broadcast %128 : vector<1x32xf32> to vector<8x32xf32>
    %130 = arith.addf %127, %129 : vector<8x32xf32>
    %cst_56 = arith.constant 0.000000e+00 : f32
    %131 = vector.broadcast %cst_56 : f32 to vector<8x32xf32>
    %132 = arith.maximumf %130, %131 : vector<8x32xf32>
    %133 = math.absf %130 : vector<8x32xf32>
    %cst_57 = arith.constant 0.000000e+00 : f32
    %134 = vector.broadcast %cst_57 : f32 to vector<8x32xf32>
    %135 = arith.subf %134, %133 : vector<8x32xf32>
    %136 = math.exp %135 : vector<8x32xf32>
    %cst_58 = arith.constant 1.000000e+00 : f32
    %137 = vector.broadcast %cst_58 : f32 to vector<8x32xf32>
    %138 = arith.addf %137, %136 : vector<8x32xf32>
    %139 = math.log %138 : vector<8x32xf32>
    %140 = arith.addf %132, %139 : vector<8x32xf32>
    %cst_59 = arith.constant 0.693147182 : f32
    %141 = vector.broadcast %cst_59 : f32 to vector<8x32xf32>
    %142 = arith.subf %140, %141 : vector<8x32xf32>
    %c728 = arith.constant 728 : index
    %c0_60 = arith.constant 0 : index
    %143 = vector.load %arg0[%c728, %c0_60] : memref<840x256xf32, #tpu.memory_space<vmem>>, vector<32x32xf32>
    %cst_61 = arith.constant dense<0.000000e+00> : vector<8x32xf32>
    %144 = tpu.matmul %142, %143, %cst_61 {dimension_numbers = #tpu.dot_dimension_numbers<[1], [0], [0], [1], [0, 0, 1, 1], [], []>} : vector<8x32xf32>, vector<32x32xf32>, vector<8x32xf32> -> vector<8x32xf32>
    %145 = arith.addf %121, %144 : vector<8x32xf32>
    %c5 = arith.constant 5 : index
    %c0_62 = arith.constant 0 : index
    %146 = vector.load %arg1[%c5, %c0_62] : memref<16x256xf32, #tpu.memory_space<vmem>>, vector<1x32xf32>
    %147 = vector.broadcast %146 : vector<1x32xf32> to vector<8x32xf32>
    %148 = arith.addf %145, %147 : vector<8x32xf32>
    %c792 = arith.constant 792 : index
    %c0_63 = arith.constant 0 : index
    %149 = vector.load %arg0[%c792, %c0_63] : memref<840x256xf32, #tpu.memory_space<vmem>>, vector<32x16xf32>
    %cst_64 = arith.constant dense<0.000000e+00> : vector<8x16xf32>
    %150 = tpu.matmul %148, %149, %cst_64 {dimension_numbers = #tpu.dot_dimension_numbers<[1], [0], [0], [1], [0, 0, 1, 1], [], []>} : vector<8x32xf32>, vector<32x16xf32>, vector<8x16xf32> -> vector<8x16xf32>
    %c7 = arith.constant 7 : index
    %c0_65 = arith.constant 0 : index
    %151 = vector.load %arg1[%c7, %c0_65] : memref<16x256xf32, #tpu.memory_space<vmem>>, vector<1x16xf32>
    %152 = vector.broadcast %151 : vector<1x16xf32> to vector<8x16xf32>
    %153 = arith.addf %150, %152 : vector<8x16xf32>
    %cst_66 = arith.constant 0.000000e+00 : f32
    %154 = vector.broadcast %cst_66 : f32 to vector<8x16xf32>
    %155 = arith.maximumf %153, %154 : vector<8x16xf32>
    %156 = math.absf %153 : vector<8x16xf32>
    %cst_67 = arith.constant 0.000000e+00 : f32
    %157 = vector.broadcast %cst_67 : f32 to vector<8x16xf32>
    %158 = arith.subf %157, %156 : vector<8x16xf32>
    %159 = math.exp %158 : vector<8x16xf32>
    %cst_68 = arith.constant 1.000000e+00 : f32
    %160 = vector.broadcast %cst_68 : f32 to vector<8x16xf32>
    %161 = arith.addf %160, %159 : vector<8x16xf32>
    %162 = math.log %161 : vector<8x16xf32>
    %163 = arith.addf %155, %162 : vector<8x16xf32>
    %cst_69 = arith.constant 0.693147182 : f32
    %164 = vector.broadcast %cst_69 : f32 to vector<8x16xf32>
    %165 = arith.subf %163, %164 : vector<8x16xf32>
    %c824 = arith.constant 824 : index
    %c0_70 = arith.constant 0 : index
    %166 = vector.load %arg0[%c824, %c0_70] : memref<840x256xf32, #tpu.memory_space<vmem>>, vector<16x128xf32>
    %cst_71 = arith.constant dense<0.000000e+00> : vector<8x128xf32>
    %167 = tpu.matmul %165, %166, %cst_71 {dimension_numbers = #tpu.dot_dimension_numbers<[1], [0], [0], [1], [0, 0, 1, 1], [], []>} : vector<8x16xf32>, vector<16x128xf32>, vector<8x128xf32> -> vector<8x128xf32>
    %c8_72 = arith.constant 8 : index
    %c0_73 = arith.constant 0 : index
    %168 = vector.load %arg1[%c8_72, %c0_73] : memref<16x256xf32, #tpu.memory_space<vmem>>, vector<1x128xf32>
    %169 = vector.broadcast %168 : vector<1x128xf32> to vector<8x128xf32>
    %170 = arith.addf %167, %169 : vector<8x128xf32>
    %cst_74 = arith.constant dense<0.000000e+00> : vector<8x128xf32>
    %171 = tpu.matmul %29, %170, %cst_74 {dimension_numbers = #tpu.dot_dimension_numbers<[1], [0], [0], [1], [0, 0, 1, 1], [], []>} : vector<8x8xf32>, vector<8x128xf32>, vector<8x128xf32> -> vector<8x128xf32>
    %c0_75 = arith.constant 0 : index
    %c0_76 = arith.constant 0 : index
    %172 = vector.load %arg4[%c0_75, %c0_76] : memref<8x128xf32, #tpu.memory_space<vmem>>, vector<8x128xf32>
    tpu.vector_store %arg4[%c0_75, %c0_76], %171 {strides = array<i32>} : memref<8x128xf32, #tpu.memory_space<vmem>>, vector<8x128xf32>,
    return
  }
}

</mosaic_0001>

<llo_original>
// kernel: schnet_forward.1
$region0: #{schnet_forward.1}
  #allocation0 [shape = 'u32[]', space=smem, size = 0x4, offset = 0x4, fixed_abs, tag = 'smem constant byte address 0x4 - core index']
  #allocation1 [shape = 'u32[144,128]{1,0:T(1,128)}', space=vmem, size = 0x12000, scoped, tag = 'internal scratch']
  %s0 = inlined_call_operand.hbm [shape: f32[840,256], index: 0, kind: input, shape index: {}]
  %s1 = inlined_call_operand.vmem [shape: f32[16,256], index: 1, kind: input, shape index: {}]
  %s2 = inlined_call_operand.vmem [shape: f32[32,3], index: 2, kind: input, shape index: {}]
  %s3 = inlined_call_operand.vmem [shape: s32[18,16], index: 3, kind: input, shape index: {}]
  %s4 = inlined_call_operand.vmem [shape: f32[8,128], index: 4, kind: output, shape index: {}]
  %s5 = sld [smem:[#allocation0]]
  $region30: #{schnet_forward.1} parent=0
    _
  %s7 = ssub.s32 1, %s5
  %s8 = scalar_select 0, %s7, %s5
  $region1: #{schnet_forward.1} parent=0
    #allocation2 [shape = 'u8[860160]{0}', space=vmem, size = 0xd2000, scoped, tag = 'input window, operand 0, single buffered']
    #allocation3 [shape = 's32[1]{0}', space=sflag, size = 0x4, scoped, tag = 'scoped memory for schnet_forward.1']
    %9 = vsyncpa [#allocation3], 0
    // Predicated region
    $region2: #{schnet_forward.1} parent=1 // pred_check
      _
    $region3: #{schnet_forward.1} parent=1 // pred_check_branch
      %11 = sbr.rel (0) target = $region5
    $region4: #{schnet_forward.1} parent=1 // pred_region
      %s13 = ssub.s32 26880, 26880
      %14 = vsyncadd [#allocation3], %s13
      %s15 = sshll.u32 [#allocation2], 4
      %s16 = int_to_ptr.vmem [resolvable:$true] %s15
      %21 = dma.hbm_to_vmem [thread:$0]  %s0, 26880, %s16, [#allocation3], 256, 256, 16
    $region5: #{schnet_forward.1} parent=1 // pred_fallthru
      _
    // Predicated region
    $region6: #{schnet_forward.1} parent=1 // pred_check
      _
    $region7: #{schnet_forward.1} parent=1 // pred_check_branch
      %23 = sbr.rel (0) target = $region9
    $region8: #{schnet_forward.1} parent=1 // pred_region
      _
    $region9: #{schnet_forward.1} parent=1 // pred_fallthru
      _
    // Predicated region
    $region10: #{schnet_forward.1} parent=1 // pred_check
      _
    $region11: #{schnet_forward.1} parent=1 // pred_check_branch
      %25 = sbr.rel (0) target = $region13
    $region12: #{schnet_forward.1} parent=1 // pred_region
      _
    $region13: #{schnet_forward.1} parent=1 // pred_fallthru
      _
    // Predicated region
    $region14: #{schnet_forward.1} parent=1 // pred_check
      _
    $region15: #{schnet_forward.1} parent=1 // pred_check_branch
      %27 = sbr.rel (0) target = $region17
    $region16: #{schnet_forward.1} parent=1 // pred_region
      _
    $region17: #{schnet_forward.1} parent=1 // pred_fallthru
      _
    // Predicated region
    $region18: #{schnet_forward.1} parent=1 // pred_check
      _
    $region19: #{schnet_forward.1} parent=1 // pred_check_branch
      %29 = sbr.rel (0) target = $region21
    $region20: #{schnet_forward.1} parent=1 // pred_region
      %30 = dma.done [#allocation3], 26880
    $region21: #{schnet_forward.1} parent=1 // pred_fallthru
      _
    %v31 = vld [vmem:[%s3] sm:$0xff]
    %v32 = vld [vmem:[%s3 + $0x8] sm:$0xf]
    %v33 = vld [vmem:[%s3 + $0x10] sm:$0x1]
    %v34 = vld [vmem:[%s3 + $0x11] sm:$0x1]
    %v35 = vlaneseq
    %v36 = vand.u32 %v35, 127
    %37 = vset.pattern.permute.xlu0 0
    %38 = vperm.xlu0 %37, %v31
    %v39 = vpop.permute.xlu0 %38
    %vm40 = vcmp.eq.s32.totalorder %v39, %v36
    %v41 = vsel %vm40, 1, 0
    %v42 = vcvt.s32.f32 %v41
    %43 = vset.pattern.permute.xlu0 1
    %44 = vperm.xlu0 %43, %v31
    %v45 = vpop.permute.xlu0 %44
    %46 = vset.pattern.permute.xlu0 1
    %47 = vperm.xlu0 %46, %v32
    %v48 = vpop.permute.xlu0 %47
    %vm49 = vcmp.eq.s32.totalorder %v45, %v36
    %vm50 = vcmp.eq.s32.totalorder %v48, %v36
    %v51 = vsel %vm49, 1, 0
    %v52 = vsel %vm50, 1, 0
    %v53 = vcvt.s32.f32 %v51
    %v54 = vcvt.s32.f32 %v52
    %55 = vset.pattern.permute.xlu0 2
    %56 = vperm.xlu0 %55, %v31
    %v57 = vpop.permute.xlu0 %56
    %58 = vset.pattern.permute.xlu0 2
    %59 = vperm.xlu0 %58, %v32
    %v60 = vpop.permute.xlu0 %59
    %vm61 = vcmp.eq.s32.totalorder %v57, %v36
    %vm62 = vcmp.eq.s32.totalorder %v60, %v36
    %v63 = vsel %vm61, 1, 0
    %v64 = vsel %vm62, 1, 0
    %v65 = vcvt.s32.f32 %v63
    %v66 = vcvt.s32.f32 %v64
    %v67 = vlaneseq
    %v68 = vshrl.u32 %v67, 7
    %v69 = vlaneseq
    %v70 = vshrl.u32 %v69, 7
    %v71 = vsub.s32 0, %v70
    %v72 = vrot.slane %v33, %v71
    %vm73 = vcmp.eq.s32.totalorder %v68, %v72
    %v74 = vsel %vm73, 1, 0
    %v75 = vcvt.s32.f32 %v74
    %v76 = vlaneseq
    %v77 = vshrl.u32 %v76, 7
    %v78 = vsub.s32 0, %v77
    %v79 = vrot.slane %v34, %v78
    %vm80 = vcmp.eq.s32.totalorder %v68, %v79
    %v81 = vsel %vm80, 1, 0
    %v82 = vcvt.s32.f32 %v81
    %v83 = vld [vmem:[%s2] sm:$0xff]
    %v84 = vld [vmem:[%s2 + $0x8] sm:$0xff]
    %v85 = vld [vmem:[%s2 + $0x10] sm:$0xf]
    %v86 = vld [vmem:[%s2 + $0x18] sm:$0x7]
    %v87 = vsub.f32 %v53, %v65
    %v88 = vsub.f32 %v54, %v66
    %vm89 = vcmask 23552
    %v91 = vsel %vm89, %v84, 0
    %v94 = vsel %vm89, %v85, 0
    %vm96 = vcmask 1042432
    %v98 = vsel %vm96, %v86, 0
    %100 = vmatprep.subr.mxu0 0.0
    %101 = vmatpush1.msra.mxu0 %v98
    %102 = vmatprep.subr.mxu0 0.0
    %103 = vmatpush1.msra.mxu0 0.0
    %104 = vmatprep.subr.mxu0 0.0
    %105 = vmatpush1.msra.mxu0 0.0
    %106 = vmatprep.subr.mxu0 0.0
    %107 = vmatpush1.msra.mxu0 0.0
    %108 = vmatprep.subr.mxu0 0.0
    %109 = vmatpush1.msra.mxu0 0.0
    %110 = vmatprep.subr.mxu0 0.0
    %111 = vmatpush1.msra.mxu0 0.0
    %112 = vmatprep.subr.mxu0 0.0
    %113 = vmatpush1.msra.mxu0 0.0
    %114 = vmatprep.subr.mxu0 0.0
    %115 = vmatpush1.msra.mxu0 0.0
    %116 = vmatprep.subr.mxu0 0.0
    %117 = vmatpush1.msra.mxu0 0.0
    %118 = vmatprep.subr.mxu0 0.0
    %119 = vmatpush1.msra.mxu0 0.0
    %120 = vmatprep.subr.mxu0 0.0
    %121 = vmatpush1.msra.mxu0 0.0
    %122 = vmatprep.subr.mxu0 0.0
    %123 = vmatpush1.msra.mxu0 0.0
    %124 = vmatprep.subr.mxu0 0.0
    %125 = vmatpush1.msra.mxu0 0.0
    %126 = vmatprep.subr.mxu0 0.0
    %127 = vmatpush1.msra.mxu0 0.0
    %128 = vmatprep.subr.mxu0 0.0
    %129 = vmatpush1.msra.mxu0 0.0
    %130 = vmatprep.subr.mxu0 0.0
    %131 = vmatpush1.msra.mxu0 0.0
    %132 = vmatprep.subr.mxu0 0.0
    %133 = vmatpush1.msra.mxu0 0.0
    %134 = vmatprep.subr.mxu0 0.0
    %135 = vmatpush1.msra.mxu0 0.0
    %136 = vmatprep.subr.mxu0 0.0
    %137 = vmatpush1.msra.mxu0 0.0
    %138 = vmatprep.subr.mxu0 0.0
    %139 = vmatpush1.msra.mxu0 0.0
    %140 = vmatprep.subr.mxu0 0.0
    %141 = vmatpush1.msra.mxu0 0.0
    %142 = vmatprep.subr.mxu0 0.0
    %143 = vmatpush1.msra.mxu0 0.0
    %144 = vmatprep.subr.mxu0 0.0
    %145 = vmatpush1.msra.mxu0 0.0
    %146 = vmatprep.subr.mxu0 0.0
    %147 = vmatpush1.msra.mxu0 0.0
    %148 = vmatprep.subr.mxu0 0.0
    %149 = vmatpush1.msra.mxu0 0.0
    %150 = vmatprep.subr.mxu0 0.0
    %151 = vmatpush1.msra.mxu0 0.0
    %152 = vmatprep.subr.mxu0 0.0
    %153 = vmatpush1.msra.mxu0 0.0
    %154 = vmatprep.subr.mxu0 0.0
    %155 = vmatpush1.msra.mxu0 0.0
    %156 = vmatprep.subr.mxu0 0.0
    %157 = vmatpush1.msra.mxu0 0.0
    %158 = vmatprep.subr.mxu0 0.0
    %159 = vmatpush1.msra.mxu0 0.0
    %160 = vmatprep.subr.mxu0 0.0
    %161 = vmatpush1.msra.mxu0 0.0
    %162 = vmatprep.subr.mxu0 0.0
    %163 = vmatpush1.msra.mxu0 0.0
    %164 = vmatprep.mubr.f32.mxu0 0.0
    %165 = vmatmul.mubr.f32.gmra.mrb[0].mxu0 %v91
    %v166 = vpop.f32.mrb[0].mxu0
    %v167 = vadd.f32 0.0, %v166
    %v168 = vpop.f32.mrb[0].mxu0
    %169 = vmatprep.mubr.f32.mxu0 0.0
    %170 = vmatmul.mubr.f32.gmra.mrb[0].mxu0 %v94
    %v171 = vpop.f32.mrb[0].mxu0
    %v172 = vadd.f32 0.0, %v171
    %v173 = vpop.f32.mrb[0].mxu0
    %174 = vdwg.mxu0
    %vm175 = vcmask 64512
    %v177 = vsel %vm175, %v87, 0
    %v180 = vsel %vm175, %v88, 0
    %182 = vmatprep.subr.mxu0 0.0
    %183 = vmatpush1.msra.mxu0 %v83
    %184 = vmatprep.subr.mxu0 0.0
    %185 = vmatpush1.msra.mxu0 0.0
    %186 = vmatprep.subr.mxu0 0.0
    %187 = vmatpush1.msra.mxu0 0.0
    %188 = vmatprep.subr.mxu0 0.0
    %189 = vmatpush1.msra.mxu0 0.0
    %190 = vmatprep.subr.mxu0 0.0
    %191 = vmatpush1.msra.mxu0 0.0
    %192 = vmatprep.subr.mxu0 0.0
    %193 = vmatpush1.msra.mxu0 0.0
    %194 = vmatprep.subr.mxu0 0.0
    %195 = vmatpush1.msra.mxu0 0.0
    %196 = vmatprep.subr.mxu0 0.0
    %197 = vmatpush1.msra.mxu0 0.0
    %198 = vmatprep.subr.mxu0 0.0
    %199 = vmatpush1.msra.mxu0 0.0
    %200 = vmatprep.subr.mxu0 0.0
    %201 = vmatpush1.msra.mxu0 0.0
    %202 = vmatprep.subr.mxu0 0.0
    %203 = vmatpush1.msra.mxu0 0.0
    %204 = vmatprep.subr.mxu0 0.0
    %205 = vmatpush1.msra.mxu0 0.0
    %206 = vmatprep.subr.mxu0 0.0
    %207 = vmatpush1.msra.mxu0 0.0
    %208 = vmatprep.subr.mxu0 0.0
    %209 = vmatpush1.msra.mxu0 0.0
    %210 = vmatprep.subr.mxu0 0.0
    %211 = vmatpush1.msra.mxu0 0.0
    %212 = vmatprep.subr.mxu0 0.0
    %213 = vmatpush1.msra.mxu0 0.0
    %214 = vmatprep.subr.mxu0 0.0
    %215 = vmatpush1.msra.mxu0 0.0
    %216 = vmatprep.subr.mxu0 0.0
    %217 = vmatpush1.msra.mxu0 0.0
    %218 = vmatprep.subr.mxu0 0.0
    %219 = vmatpush1.msra.mxu0 0.0
    %220 = vmatprep.subr.mxu0 0.0
    %221 = vmatpush1.msra.mxu0 0.0
    %222 = vmatprep.subr.mxu0 0.0
    %223 = vmatpush1.msra.mxu0 0.0
    %224 = vmatprep.subr.mxu0 0.0
    %225 = vmatpush1.msra.mxu0 0.0
    %226 = vmatprep.subr.mxu0 0.0
    %227 = vmatpush1.msra.mxu0 0.0
    %228 = vmatprep.subr.mxu0 0.0
    %229 = vmatpush1.msra.mxu0 0.0
    %230 = vmatprep.subr.mxu0 0.0
    %231 = vmatpush1.msra.mxu0 0.0
    %232 = vmatprep.subr.mxu0 0.0
    %233 = vmatpush1.msra.mxu0 0.0
    %234 = vmatprep.subr.mxu0 0.0
    %235 = vmatpush1.msra.mxu0 0.0
    %236 = vmatprep.subr.mxu0 0.0
    %237 = vmatpush1.msra.mxu0 0.0
    %238 = vmatprep.subr.mxu0 0.0
    %239 = vmatpush1.msra.mxu0 0.0
    %240 = vmatprep.subr.mxu0 0.0
    %241 = vmatpush1.msra.mxu0 0.0
    %242 = vmatprep.subr.mxu0 0.0
    %243 = vmatpush1.msra.mxu0 0.0
    %244 = vmatprep.subr.mxu0 0.0
    %245 = vmatpush1.msra.mxu0 0.0
    %246 = vmatprep.mubr.f32.mxu0 0.0
    %247 = vmatmul.mubr.f32.gmra.mrb[0].mxu0 %v177
    %v248 = vpop.f32.mrb[0].mxu0
    %v249 = vadd.f32 %v167, %v248
    %v250 = vpop.f32.mrb[0].mxu0
    %251 = vmatprep.mubr.f32.mxu0 0.0
    %252 = vmatmul.mubr.f32.gmra.mrb[0].mxu0 %v180
    %v253 = vpop.f32.mrb[0].mxu0
    %v254 = vadd.f32 %v172, %v253
    %v255 = vpop.f32.mrb[0].mxu0
    %256 = vdwg.mxu0
    %v257 = vmul.f32 %v249, %v249
    %v258 = vmul.f32 %v254, %v254
    %v259 = vsel %vm89, %v257, 0.0
    %260 = vadd.xlane.f32.xlu0 %v259
    %v261 = vpop.xlane.xlu0 %260
    %vm262 = vcmask 19456
    %v263 = vsel %vm262, %v258, 0.0
    %264 = vadd.xlane.f32.xlu0 %v263
    %v265 = vpop.xlane.xlu0 %264
    %v266 = vrsqrt.pop %v261
    %v267 = vmul.f32 %v261, %v266
    %vm268 = vcmp.eq.f32.partialorder %v261, inf
    %v269 = vsel %vm268, %v261, %v267
    %vm270 = vcmp.eq.f32.partialorder %v261, 0.0
    %v271 = vand.u32 %v261, 2147483648
    %v272 = vsel %vm270, %v271, %v269
    %v273 = vrsqrt.pop %v265
    %v274 = vmul.f32 %v265, %v273
    %vm275 = vcmp.eq.f32.partialorder %v265, inf
    %v276 = vsel %vm275, %v265, %v274
    %vm277 = vcmp.eq.f32.partialorder %v265, 0.0
    %v278 = vand.u32 %v265, 2147483648
    %v279 = vsel %vm277, %v278, %v276
    %v280 = vcvt.s32.f32 %v36
    %v281 = vmul.f32 %v280, 0.26666668
    %v282 = vsub.f32 %v272, %v281
    %v283 = vsub.f32 %v279, %v281
    %v284 = vmul.f32 %v282, %v282
    %v285 = vmul.f32 %v283, %v283
    %v286 = vmul.f32 %v284, -7.03125
    %v287 = vmul.f32 %v285, -7.03125
    %v288 = vmul.f32 %v286, 1.442695
    %v289 = vpow.pop %v288
    %v290 = vmul.f32 %v287, 1.442695
    %v291 = vpow.pop %v290
    %v292 = vmul.f32 %v272, 0.7853982
    %v293 = vmul.f32 %v279, 0.7853982
    %v294 = vand.u32 2147483647, %v292
    %vm295 = vcmp.le.f32.partialorder %v294, 0.7853982
    %vm296 = vcmp.lt.s32.totalorder %v292, 0
    %v297 = vand.u32 %v292, 2139095040
    %v298 = vshrl.u32 %v297, 23
    %v299 = vsub.s32 %v298, 127
    %v300 = vand.u32 2147483647, %v292
    %v301 = vand.u32 %v300, 8388607
    %v302 = vor.u32 %v301, 8388608
    %v303 = vsub.s32 0, %v302
    %v304 = vadd.s32 %v299, 1
    %vm305 = vcmp.gt.s32.totalorder %v304, 0
    %v306 = vsel %vm305, %v304, 0
    %v307 = vshrl.u32 %v306, 5
    %v308 = vand.u32 %v306, 31
    %v309 = vsub.s32 32, %v308
    %v310 = vshrl.u32 683565275, %v309
    %v311 = vshll.u32 683565275, %v308
    %v312 = vshrl.u32 2475754826, %v309
    %v313 = vor.u32 %v311, %v312
    %v314 = vshll.u32 2475754826, %v308
    %v315 = vshrl.u32 2131351028, %v309
    %v316 = vor.u32 %v314, %v315
    %v317 = vshll.u32 2131351028, %v308
    %v318 = vshrl.u32 2102212464, %v309
    %v319 = vor.u32 %v317, %v318
    %v320 = vshll.u32 2102212464, %v308
    %v321 = vshrl.u32 920167782, %v309
    %v322 = vor.u32 %v320, %v321
    %v323 = vshll.u32 920167782, %v308
    %v324 = vshrl.u32 1326507024, %v309
    %v325 = vor.u32 %v323, %v324
    %vm326 = vcmp.lt.s32.totalorder %v307, 1
    %vm327 = vcmp.lt.s32.totalorder %v307, 2
    %vm328 = vcmp.lt.s32.totalorder %v307, 3
    %vm329 = vcmp.lt.s32.totalorder %v307, 4
    %v330 = vsel %vm326, %v310, %v313
    %v331 = vsel %vm329, %v319, 2102212464
    %v332 = vsel %vm328, %v316, %v331
    %v333 = vsel %vm327, %v330, %v332
    %v334 = vsel %vm326, %v313, %v316
    %v335 = vsel %vm329, %v322, 920167782
    %v336 = vsel %vm328, %v319, %v335
    %v337 = vsel %vm327, %v334, %v336
    %v338 = vsel %vm326, %v316, %v319
    %v339 = vsel %vm329, %v325, 1326507024
    %v340 = vsel %vm328, %v322, %v339
    %v341 = vsel %vm327, %v338, %v340
    %v342 = vshll.u32 %v302, 8
    %v343 = vmul.u32.u64.compose %v342, %v341
    %v344 = vextract.low.u32 %v343
    %v345 = vextract.high.u32 %v343
    %v346 = vmul.u32.u64.compose %v342, %v337
    %v347 = vextract.low.u32 %v346
    %v348 = vextract.high.u32 %v346
    %v349 = vmul.u32 %v342, %v333
    %v350 = vadd.s32 %v345, %v347
    %vm351 = vc.u32 %v345, %v347
    %v352 = vadd.s32 %v348, 1
    %v353 = vsel %vm351, %v352, %v348
    %v354 = vadd.s32 %v349, %v353
    %v355 = vadd.s32 %v354, 536870912
    %v356 = vshrl.u32 %v355, 30
    %v357 = vshll.u32 %v356, 30
    %v358 = vsub.s32 %v354, %v357
    %vm359 = vcmp.lt.s32.totalorder %v358, 0
    %v360 = vsub.s32 0, %v358
    %v361 = vsel %vm359, %v360, %v358
    %v362 = vclz %v361
    %v363 = vsub.s32 %v362, 2
    %vm364 = vcmp.gt.s32.totalorder 0, %v363
    %v365 = vsel %vm364, 0, %v363
    %v366 = vsub.s32 32, %v365
    %v367 = vshll.u32 %v358, %v365
    %v368 = vshrl.u32 %v350, %v366
    %v369 = vor.u32 %v367, %v368
    %v370 = vsub.s32 4294967266, %v365
    %v371 = vadd.s32 %v370, 127
    %v372 = vshll.u32 %v371, 23
    %v373 = vor.u32 4788187, %v372
    %v374 = vand.u32 2147483647, %v373
    %v376 = vcvt.s32.f32 %v369
    %v377 = vmul.f32 %v376, %v374
    %v378 = vxor.u32 %v377, 2147483648
    %v379 = vsel %vm296, %v378, %v377
    %v380 = vsub.s32 4, %v356
    %v381 = vsel %vm296, %v380, %v356
    %v382 = vsel %vm295, %v292, %v379
    %v383 = vsel %vm295, 0, %v381
    %v384 = vcosq.f32.pop %v382
    %v385 = vsinq.f32.pop %v382
    %vm386 = vweird.f32 %v292
    %v387 = vand.u32 %v383, 3
    %vm388 = vcmp.lt.s32.totalorder %v387, 2
    %vm389 = vcmp.eq.s32.totalorder %v387, 0
    %v390 = vxor.u32 %v385, 2147483648
    %v391 = vsel %vm389, %v384, %v390
    %vm392 = vcmp.eq.s32.totalorder %v387, 2
    %v393 = vxor.u32 %v384, 2147483648
    %v394 = vsel %vm392, %v393, %v385
    %v395 = vsel %vm388, %v391, %v394
    %v396 = vsel %vm386, nan, %v395
    %v397 = vand.u32 2147483647, %v293
    %vm398 = vcmp.le.f32.partialorder %v397, 0.7853982
    %vm399 = vcmp.lt.s32.totalorder %v293, 0
    %v400 = vand.u32 %v293, 2139095040
    %v401 = vshrl.u32 %v400, 23
    %v402 = vsub.s32 %v401, 127
    %v403 = vand.u32 2147483647, %v293
    %v404 = vand.u32 %v403, 8388607
    %v405 = vor.u32 %v404, 8388608
    %v406 = vsub.s32 0, %v405
    %v407 = vadd.s32 %v402, 1
    %vm408 = vcmp.gt.s32.totalorder %v407, 0
    %v409 = vsel %vm408, %v407, 0
    %v410 = vshrl.u32 %v409, 5
    %v411 = vand.u32 %v409, 31
    %v412 = vsub.s32 32, %v411
    %v413 = vshrl.u32 683565275, %v412
    %v414 = vshll.u32 683565275, %v411
    %v415 = vshrl.u32 2475754826, %v412
    %v416 = vor.u32 %v414, %v415
    %v417 = vshll.u32 2475754826, %v411
    %v418 = vshrl.u32 2131351028, %v412
    %v419 = vor.u32 %v417, %v418
    %v420 = vshll.u32 2131351028, %v411
    %v421 = vshrl.u32 2102212464, %v412
    %v422 = vor.u32 %v420, %v421
    %v423 = vshll.u32 2102212464, %v411
    %v424 = vshrl.u32 920167782, %v412
    %v425 = vor.u32 %v423, %v424
    %v426 = vshll.u32 920167782, %v411
    %v427 = vshrl.u32 1326507024, %v412
    %v428 = vor.u32 %v426, %v427
    %vm429 = vcmp.lt.s32.totalorder %v410, 1
    %vm430 = vcmp.lt.s32.totalorder %v410, 2
    %vm431 = vcmp.lt.s32.totalorder %v410, 3
    %vm432 = vcmp.lt.s32.totalorder %v410, 4
    %v433 = vsel %vm429, %v413, %v416
    %v434 = vsel %vm432, %v422, 2102212464
    %v435 = vsel %vm431, %v419, %v434
    %v436 = vsel %vm430, %v433, %v435
    %v437 = vsel %vm429, %v416, %v419
    %v438 = vsel %vm432, %v425, 920167782
    %v439 = vsel %vm431, %v422, %v438
    %v440 = vsel %vm430, %v437, %v439
    %v441 = vsel %vm429, %v419, %v422
    %v442 = vsel %vm432, %v428, 1326507024
    %v443 = vsel %vm431, %v425, %v442
    %v444 = vsel %vm430, %v441, %v443
    %v445 = vshll.u32 %v405, 8
    %v446 = vmul.u32.u64.compose %v445, %v444
    %v447 = vextract.low.u32 %v446
    %v448 = vextract.high.u32 %v446
    %v449 = vmul.u32.u64.compose %v445, %v440
    %v450 = vextract.low.u32 %v449
    %v451 = vextract.high.u32 %v449
    %v452 = vmul.u32 %v445, %v436
    %v453 = vadd.s32 %v448, %v450
    %vm454 = vc.u32 %v448, %v450
    %v455 = vadd.s32 %v451, 1
    %v456 = vsel %vm454, %v455, %v451
    %v457 = vadd.s32 %v452, %v456
    %v458 = vadd.s32 %v457, 536870912
    %v459 = vshrl.u32 %v458, 30
    %v460 = vshll.u32 %v459, 30
    %v461 = vsub.s32 %v457, %v460
    %vm462 = vcmp.lt.s32.totalorder %v461, 0
    %v463 = vsub.s32 0, %v461
    %v464 = vsel %vm462, %v463, %v461
    %v465 = vclz %v464
    %v466 = vsub.s32 %v465, 2
    %vm467 = vcmp.gt.s32.totalorder 0, %v466
    %v468 = vsel %vm467, 0, %v466
    %v469 = vsub.s32 32, %v468
    %v470 = vshll.u32 %v461, %v468
    %v471 = vshrl.u32 %v453, %v469
    %v472 = vor.u32 %v470, %v471
    %v473 = vsub.s32 4294967266, %v468
    %v474 = vadd.s32 %v473, 127
    %v475 = vshll.u32 %v474, 23
    %v476 = vor.u32 4788187, %v475
    %v477 = vand.u32 2147483647, %v476
    %v479 = vcvt.s32.f32 %v472
    %v480 = vmul.f32 %v479, %v477
    %v481 = vxor.u32 %v480, 2147483648
    %v482 = vsel %vm399, %v481, %v480
    %v483 = vsub.s32 4, %v459
    %v484 = vsel %vm399, %v483, %v459
    %v485 = vsel %vm398, %v293, %v482
    %v486 = vsel %vm398, 0, %v484
    %v487 = vcosq.f32.pop %v485
    %v488 = vsinq.f32.pop %v485
    %vm489 = vweird.f32 %v293
    %v490 = vand.u32 %v486, 3
    %vm491 = vcmp.lt.s32.totalorder %v490, 2
    %vm492 = vcmp.eq.s32.totalorder %v490, 0
    %v493 = vxor.u32 %v488, 2147483648
    %v494 = vsel %vm492, %v487, %v493
    %vm495 = vcmp.eq.s32.totalorder %v490, 2
    %v496 = vxor.u32 %v487, 2147483648
    %v497 = vsel %vm495, %v496, %v488
    %v498 = vsel %vm491, %v494, %v497
    %v499 = vsel %vm489, nan, %v498
    %v500 = vadd.f32 %v396, 1.0
    %v501 = vadd.f32 %v499, 1.0
    %v502 = vmul.f32 %v500, 0.5
    %v503 = vmul.f32 %v501, 0.5
    %v504 = vld [vmem:[#allocation2 + $0xd0] sm:$0xff]
    %v505 = vld [vmem:[#allocation2 + $0xd8] sm:$0xff]
    %v506 = vld [vmem:[#allocation2 + $0xe0] sm:$0xff]
    %v507 = vld [vmem:[#allocation2 + $0xe8] sm:$0xff]
    %v508 = vld [vmem:[%s1] ss:$8 sm:$0x3]
    %v510 = vlaneseq
    %v511 = vshrl.u32 %v510, 7
    %v512 = vsub.s32 0, %v511
    %v513 = vrot.slane %v508, %v512
    %v514 = vlaneseq
    %v515 = vshrl.u32 %v514, 7
    %v516 = vsub.s32 1, %v515
    %v517 = vrot.slane %v508, %v516
    %vm520 = vcmask 130048
    %v522 = vsel %vm520, %v289, 0
    %v525 = vsel %vm520, %v291, 0
    %527 = vmatprep.subr.mxu0 %v505
    %528 = vmatpush1.msra.mxu0 %v504
    %529 = vmatprep.subr.mxu0 %v507
    %530 = vmatpush1.msra.mxu0 %v506
    %531 = vmatprep.subr.mxu0 0.0
    %532 = vmatpush1.msra.mxu0 0.0
    %533 = vmatprep.subr.mxu0 0.0
    %534 = vmatpush1.msra.mxu0 0.0
    %535 = vmatprep.subr.mxu0 0.0
    %536 = vmatpush1.msra.mxu0 0.0
    %537 = vmatprep.subr.mxu0 0.0
    %538 = vmatpush1.msra.mxu0 0.0
    %539 = vmatprep.subr.mxu0 0.0
    %540 = vmatpush1.msra.mxu0 0.0
    %541 = vmatprep.subr.mxu0 0.0
    %542 = vmatpush1.msra.mxu0 0.0
    %543 = vmatprep.subr.mxu0 0.0
    %544 = vmatpush1.msra.mxu0 0.0
    %545 = vmatprep.subr.mxu0 0.0
    %546 = vmatpush1.msra.mxu0 0.0
    %547 = vmatprep.subr.mxu0 0.0
    %548 = vmatpush1.msra.mxu0 0.0
    %549 = vmatprep.subr.mxu0 0.0
    %550 = vmatpush1.msra.mxu0 0.0
    %551 = vmatprep.subr.mxu0 0.0
    %552 = vmatpush1.msra.mxu0 0.0
    %553 = vmatprep.subr.mxu0 0.0
    %554 = vmatpush1.msra.mxu0 0.0
    %555 = vmatprep.subr.mxu0 0.0
    %556 = vmatpush1.msra.mxu0 0.0
    %557 = vmatprep.subr.mxu0 0.0
    %558 = vmatpush1.msra.mxu0 0.0
    %559 = vmatprep.subr.mxu0 0.0
    %560 = vmatpush1.msra.mxu0 0.0
    %561 = vmatprep.subr.mxu0 0.0
    %562 = vmatpush1.msra.mxu0 0.0
    %563 = vmatprep.subr.mxu0 0.0
    %564 = vmatpush1.msra.mxu0 0.0
    %565 = vmatprep.subr.mxu0 0.0
    %566 = vmatpush1.msra.mxu0 0.0
    %567 = vmatprep.subr.mxu0 0.0
    %568 = vmatpush1.msra.mxu0 0.0
    %569 = vmatprep.subr.mxu0 0.0
    %570 = vmatpush1.msra.mxu0 0.0
    %571 = vmatprep.subr.mxu0 0.0
    %572 = vmatpush1.msra.mxu0 0.0
    %573 = vmatprep.subr.mxu0 0.0
    %574 = vmatpush1.msra.mxu0 0.0
    %575 = vmatprep.subr.mxu0 0.0
    %576 = vmatpush1.msra.mxu0 0.0
    %577 = vmatprep.subr.mxu0 0.0
    %578 = vmatpush1.msra.mxu0 0.0
    %579 = vmatprep.subr.mxu0 0.0
    %580 = vmatpush1.msra.mxu0 0.0
    %581 = vmatprep.subr.mxu0 0.0
    %582 = vmatpush1.msra.mxu0 0.0
    %583 = vmatprep.subr.mxu0 0.0
    %584 = vmatpush1.msra.mxu0 0.0
    %585 = vmatprep.subr.mxu0 0.0
    %586 = vmatpush1.msra.mxu0 0.0
    %587 = vmatprep.subr.mxu0 0.0
    %588 = vmatpush1.msra.mxu0 0.0
    %589 = vmatprep.subr.mxu0 0.0
    %590 = vmatpush1.msra.mxu0 0.0
    %591 = vmatprep.mubr.f32.mxu0 0.0
    %592 = vmatmul.mubr.f32.gmra.mrb[0].mxu0 %v522
    %v593 = vpop.f32.mrb[0].mxu0
    %v594 = vadd.f32 %v513, %v593
    %v595 = vpop.f32.mrb[0].mxu0
    %v596 = vadd.f32 %v517, %v595
    %597 = vmatprep.mubr.f32.mxu0 0.0
    %598 = vmatmul.mubr.f32.gmra.mrb[0].mxu0 %v525
    %v599 = vpop.f32.mrb[0].mxu0
    %v600 = vadd.f32 %v513, %v599
    %v601 = vpop.f32.mrb[0].mxu0
    %v602 = vadd.f32 %v517, %v601
    %603 = vdwg.mxu0
    %v604 = vmax.f32 %v594, 0.0
    %v605 = vmax.f32 %v596, 0.0
    %v606 = vmax.f32 %v600, 0.0
    %v607 = vmax.f32 %v602, 0.0
    %v608 = vand.u32 2147483647, %v594
    %v609 = vand.u32 2147483647, %v596
    %v610 = vand.u32 2147483647, %v600
    %v611 = vand.u32 2147483647, %v602
    %v612 = vsub.f32 0.0, %v608
    %v613 = vsub.f32 0.0, %v609
    %v614 = vsub.f32 0.0, %v610
    %v615 = vsub.f32 0.0, %v611
    %v616 = vmul.f32 %v612, 1.442695
    %v617 = vpow.pop %v616
    %v618 = vmul.f32 %v613, 1.442695
    %v619 = vpow.pop %v618
    %v620 = vmul.f32 %v614, 1.442695
    %v621 = vpow.pop %v620
    %v622 = vmul.f32 %v615, 1.442695
    %v623 = vpow.pop %v622
    %v624 = vadd.f32 %v617, 1.0
    %v625 = vadd.f32 %v619, 1.0
    %v626 = vadd.f32 %v621, 1.0
    %v627 = vadd.f32 %v623, 1.0
    %v628 = vlog2.pop %v624
    %v629 = vmul.f32 %v628, 0.6931472
    %v630 = vlog2.pop %v625
    %v631 = vmul.f32 %v630, 0.6931472
    %v632 = vlog2.pop %v626
    %v633 = vmul.f32 %v632, 0.6931472
    %v634 = vlog2.pop %v627
    %v635 = vmul.f32 %v634, 0.6931472
    %v636 = vadd.f32 %v604, %v629
    %v637 = vadd.f32 %v605, %v631
    %v638 = vadd.f32 %v606, %v633
    %v639 = vadd.f32 %v607, %v635
    %v640 = vsub.f32 %v636, 0.6931472
    %v641 = vsub.f32 %v637, 0.6931472
    %v642 = vsub.f32 %v638, 0.6931472
    %v643 = vsub.f32 %v639, 0.6931472
    %v644 = vld [vmem:[#allocation2 + $0xf0] sm:$0xff]
    %v645 = vld [vmem:[#allocation2 + $0xf8] sm:$0xff]
    %v646 = vld [vmem:[#allocation2 + $0x100] sm:$0xff]
    %v647 = vld [vmem:[#allocation2 + $0x108] sm:$0xff]
    %v648 = vld [vmem:[#allocation2 + $0x110] sm:$0xff]
    %v649 = vld [vmem:[#allocation2 + $0x118] sm:$0xff]
    %v650 = vld [vmem:[#allocation2 + $0x120] sm:$0xff]
    %v651 = vld [vmem:[#allocation2 + $0x128] sm:$0xff]
    %v652 = vld [vmem:[#allocation2 + $0x130] sm:$0xff]
    %v653 = vld [vmem:[#allocation2 + $0x138] sm:$0xff]
    %v654 = vld [vmem:[#allocation2 + $0x140] sm:$0xff]
    %v655 = vld [vmem:[#allocation2 + $0x148] sm:$0xff]
    %v656 = vld [vmem:[#allocation2 + $0x150] sm:$0xff]
    %v657 = vld [vmem:[#allocation2 + $0x158] sm:$0xff]
    %v658 = vld [vmem:[#allocation2 + $0x160] sm:$0xff]
    %v659 = vld [vmem:[#allocation2 + $0x168] sm:$0xff]
    %v660 = vld [vmem:[#allocation2 + $0x170] sm:$0xff]
    %v661 = vld [vmem:[#allocation2 + $0x178] sm:$0xff]
    %v662 = vld [vmem:[#allocation2 + $0x180] sm:$0xff]
    %v663 = vld [vmem:[#allocation2 + $0x188] sm:$0xff]
    %v664 = vld [vmem:[#allocation2 + $0x190] sm:$0xff]
    %v665 = vld [vmem:[#allocation2 + $0x198] sm:$0xff]
    %v666 = vld [vmem:[#allocation2 + $0x1a0] sm:$0xff]
    %v667 = vld [vmem:[#allocation2 + $0x1a8] sm:$0xff]
    %v668 = vld [vmem:[#allocation2 + $0x1b0] sm:$0xff]
    %v669 = vld [vmem:[#allocation2 + $0x1b8] sm:$0xff]
    %v670 = vld [vmem:[#allocation2 + $0x1c0] sm:$0xff]
    %v671 = vld [vmem:[#allocation2 + $0x1c8] sm:$0xff]
    %v672 = vld [vmem:[#allocation2 + $0x1d0] sm:$0xff]
    %v673 = vld [vmem:[#allocation2 + $0x1d8] sm:$0xff]
    %v674 = vld [vmem:[#allocation2 + $0x1e0] sm:$0xff]
    %v675 = vld [vmem:[#allocation2 + $0x1e8] sm:$0xff]
    %v676 = vld [vmem:[#allocation2 + $0x1f0] sm:$0xff]
    %v677 = vld [vmem:[#allocation2 + $0x1f8] sm:$0xff]
    %v678 = vld [vmem:[#allocation2 + $0x200] sm:$0xff]
    %v679 = vld [vmem:[#allocation2 + $0x208] sm:$0xff]
    %v680 = vld [vmem:[#allocation2 + $0x210] sm:$0xff]
    %v681 = vld [vmem:[#allocation2 + $0x218] sm:$0xff]
    %v682 = vld [vmem:[#allocation2 + $0x220] sm:$0xff]
    %v683 = vld [vmem:[#allocation2 + $0x228] sm:$0xff]
    %v684 = vld [vmem:[#allocation2 + $0x230] sm:$0xff]
    %v685 = vld [vmem:[#allocation2 + $0x238] sm:$0xff]
    %v686 = vld [vmem:[#allocation2 + $0x240] sm:$0xff]
    %v687 = vld [vmem:[#allocation2 + $0x248] sm:$0xff]
    %v688 = vld [vmem:[#allocation2 + $0x250] sm:$0xff]
    %v689 = vld [vmem:[#allocation2 + $0x258] sm:$0xff]
    %v690 = vld [vmem:[#allocation2 + $0x260] sm:$0xff]
    %v691 = vld [vmem:[#allocation2 + $0x268] sm:$0xff]
    %v692 = vld [vmem:[#allocation2 + $0x270] sm:$0xff]
    %v693 = vld [vmem:[#allocation2 + $0x278] sm:$0xff]
    %v694 = vld [vmem:[#allocation2 + $0x280] sm:$0xff]
    %v695 = vld [vmem:[#allocation2 + $0x288] sm:$0xff]
    %v696 = vld [vmem:[#allocation2 + $0x290] sm:$0xff]
    %v697 = vld [vmem:[#allocation2 + $0x298] sm:$0xff]
    %v698 = vld [vmem:[#allocation2 + $0x2a0] sm:$0xff]
    %v699 = vld [vmem:[#allocation2 + $0x2a8] sm:$0xff]
    %v700 = vld [vmem:[#allocation2 + $0x2b0] sm:$0xff]
    %v701 = vld [vmem:[#allocation2 + $0x2b8] sm:$0xff]
    %v702 = vld [vmem:[#allocation2 + $0x2c0] sm:$0xff]
    %v703 = vld [vmem:[#allocation2 + $0x2c8] sm:$0xff]
    %v704 = vld [vmem:[#allocation2 + $0x2d0] sm:$0xff]
    %v705 = vld [vmem:[#allocation2 + $0x2d8] sm:$0xff]
    %v706 = vld [vmem:[#allocation2 + $0x2e0] sm:$0xff]
    %v707 = vld [vmem:[#allocation2 + $0x2e8] sm:$0xff]
    %s708 = scalar_lea.vmem %s1, 1
    %v709 = vld [vmem:[%s708] ss:$8 sm:$0x3]
    %v711 = vlaneseq
    %v712 = vshrl.u32 %v711, 7
    %v713 = vsub.s32 0, %v712
    %v714 = vrot.slane %v709, %v713
    %v715 = vlaneseq
    %v716 = vshrl.u32 %v715, 7
    %v717 = vsub.s32 1, %v716
    %v718 = vrot.slane %v709, %v717
    %721 = vmatprep.subr.mxu0 %v645
    %722 = vmatpush1.msra.mxu0 %v644
    %723 = vmatprep.subr.mxu0 %v647
    %724 = vmatpush1.msra.mxu0 %v646
    %725 = vmatprep.subr.mxu0 %v649
    %726 = vmatpush1.msra.mxu0 %v648
    %727 = vmatprep.subr.mxu0 %v651
    %728 = vmatpush1.msra.mxu0 %v650
    %729 = vmatprep.subr.mxu0 %v653
    %730 = vmatpush1.msra.mxu0 %v652
    %731 = vmatprep.subr.mxu0 %v655
    %732 = vmatpush1.msra.mxu0 %v654
    %733 = vmatprep.subr.mxu0 %v657
    %734 = vmatpush1.msra.mxu0 %v656
    %735 = vmatprep.subr.mxu0 %v659
    %736 = vmatpush1.msra.mxu0 %v658
    %737 = vmatprep.subr.mxu0 %v661
    %738 = vmatpush1.msra.mxu0 %v660
    %739 = vmatprep.subr.mxu0 %v663
    %740 = vmatpush1.msra.mxu0 %v662
    %741 = vmatprep.subr.mxu0 %v665
    %742 = vmatpush1.msra.mxu0 %v664
    %743 = vmatprep.subr.mxu0 %v667
    %744 = vmatpush1.msra.mxu0 %v666
    %745 = vmatprep.subr.mxu0 %v669
    %746 = vmatpush1.msra.mxu0 %v668
    %747 = vmatprep.subr.mxu0 %v671
    %748 = vmatpush1.msra.mxu0 %v670
    %749 = vmatprep.subr.mxu0 %v673
    %750 = vmatpush1.msra.mxu0 %v672
    %751 = vmatprep.subr.mxu0 %v675
    %752 = vmatpush1.msra.mxu0 %v674
    %753 = vmatprep.subr.mxu0 %v677
    %754 = vmatpush1.msra.mxu0 %v676
    %755 = vmatprep.subr.mxu0 %v679
    %756 = vmatpush1.msra.mxu0 %v678
    %757 = vmatprep.subr.mxu0 %v681
    %758 = vmatpush1.msra.mxu0 %v680
    %759 = vmatprep.subr.mxu0 %v683
    %760 = vmatpush1.msra.mxu0 %v682
    %761 = vmatprep.subr.mxu0 %v685
    %762 = vmatpush1.msra.mxu0 %v684
    %763 = vmatprep.subr.mxu0 %v687
    %764 = vmatpush1.msra.mxu0 %v686
    %765 = vmatprep.subr.mxu0 %v689
    %766 = vmatpush1.msra.mxu0 %v688
    %767 = vmatprep.subr.mxu0 %v691
    %768 = vmatpush1.msra.mxu0 %v690
    %769 = vmatprep.subr.mxu0 %v693
    %770 = vmatpush1.msra.mxu0 %v692
    %771 = vmatprep.subr.mxu0 %v695
    %772 = vmatpush1.msra.mxu0 %v694
    %773 = vmatprep.subr.mxu0 %v697
    %774 = vmatpush1.msra.mxu0 %v696
    %775 = vmatprep.subr.mxu0 %v699
    %776 = vmatpush1.msra.mxu0 %v698
    %777 = vmatprep.subr.mxu0 %v701
    %778 = vmatpush1.msra.mxu0 %v700
    %779 = vmatprep.subr.mxu0 %v703
    %780 = vmatpush1.msra.mxu0 %v702
    %781 = vmatprep.subr.mxu0 %v705
    %782 = vmatpush1.msra.mxu0 %v704
    %783 = vmatprep.subr.mxu0 %v707
    %784 = vmatpush1.msra.mxu0 %v706
    %785 = vmatprep.mubr.f32.mxu0 %v641
    %786 = vmatmul.mubr.f32.gmra.mrb[0].mxu0 %v640
    %v787 = vpop.f32.mrb[0].mxu0
    %v788 = vadd.f32 %v714, %v787
    %v789 = vpop.f32.mrb[0].mxu0
    %v790 = vadd.f32 %v718, %v789
    %791 = vmatprep.mubr.f32.mxu0 %v643
    %792 = vmatmul.mubr.f32.gmra.mrb[0].mxu0 %v642
    %v793 = vpop.f32.mrb[0].mxu0
    %v794 = vadd.f32 %v714, %v793
    %v795 = vpop.f32.mrb[0].mxu0
    %v796 = vadd.f32 %v718, %v795
    %797 = vdwg.mxu0
    %v798 = vmul.f32 %v788, %v502
    %v799 = vmul.f32 %v790, %v502
    %v800 = vmul.f32 %v794, %v503
    %v801 = vmul.f32 %v796, %v503
    %v802 = vld [vmem:[#allocation2] sm:$0xff]
    %v803 = vld [vmem:[#allocation2 + $0x10] sm:$0xff]
    %v804 = vld [vmem:[#allocation2 + $0x20] sm:$0xff]
    %v805 = vld [vmem:[#allocation2 + $0x30] sm:$0xff]
    %v806 = vld [vmem:[#allocation2 + $0x40] sm:$0xff]
    %v807 = vld [vmem:[#allocation2 + $0x50] sm:$0xff]
    %v808 = vld [vmem:[#allocation2 + $0x60] sm:$0xff]
    %v809 = vld [vmem:[#allocation2 + $0x70] sm:$0xff]
    %v810 = vld [vmem:[#allocation2 + $0x80] sm:$0xff]
    %v811 = vld [vmem:[#allocation2 + $0x90] sm:$0xff]
    %v812 = vld [vmem:[#allocation2 + $0xa0] sm:$0xff]
    %v813 = vld [vmem:[#allocation2 + $0xb0] sm:$0xff]
    %v814 = vld [vmem:[#allocation2 + $0xc0] sm:$0xff]
    %vm815 = vcmask 850944
    %v817 = vsel %vm815, %v42, 0
    %819 = vmatprep.subr.mxu0 0.0
    %820 = vmatpush1.msra.mxu0 %v802
    %821 = vmatprep.subr.mxu0 0.0
    %822 = vmatpush1.msra.mxu0 %v803
    %823 = vmatprep.subr.mxu0 0.0
    %824 = vmatpush1.msra.mxu0 %v804
    %825 = vmatprep.subr.mxu0 0.0
    %826 = vmatpush1.msra.mxu0 %v805
    %827 = vmatprep.subr.mxu0 0.0
    %828 = vmatpush1.msra.mxu0 %v806
    %829 = vmatprep.subr.mxu0 0.0
    %830 = vmatpush1.msra.mxu0 %v807
    %831 = vmatprep.subr.mxu0 0.0
    %832 = vmatpush1.msra.mxu0 %v808
    %833 = vmatprep.subr.mxu0 0.0
    %834 = vmatpush1.msra.mxu0 %v809
    %835 = vmatprep.subr.mxu0 0.0
    %836 = vmatpush1.msra.mxu0 %v810
    %837 = vmatprep.subr.mxu0 0.0
    %838 = vmatpush1.msra.mxu0 %v811
    %839 = vmatprep.subr.mxu0 0.0
    %840 = vmatpush1.msra.mxu0 %v812
    %841 = vmatprep.subr.mxu0 0.0
    %842 = vmatpush1.msra.mxu0 %v813
    %843 = vmatprep.subr.mxu0 0.0
    %844 = vmatpush1.msra.mxu0 %v814
    %845 = vmatprep.subr.mxu0 0.0
    %846 = vmatpush1.msra.mxu0 0.0
    %847 = vmatprep.subr.mxu0 0.0
    %848 = vmatpush1.msra.mxu0 0.0
    %849 = vmatprep.subr.mxu0 0.0
    %850 = vmatpush1.msra.mxu0 0.0
    %851 = vmatprep.subr.mxu0 0.0
    %852 = vmatpush1.msra.mxu0 0.0
    %853 = vmatprep.subr.mxu0 0.0
    %854 = vmatpush1.msra.mxu0 0.0
    %855 = vmatprep.subr.mxu0 0.0
    %856 = vmatpush1.msra.mxu0 0.0
    %857 = vmatprep.subr.mxu0 0.0
    %858 = vmatpush1.msra.mxu0 0.0
    %859 = vmatprep.subr.mxu0 0.0
    %860 = vmatpush1.msra.mxu0 0.0
    %861 = vmatprep.subr.mxu0 0.0
    %862 = vmatpush1.msra.mxu0 0.0
    %863 = vmatprep.subr.mxu0 0.0
    %864 = vmatpush1.msra.mxu0 0.0
    %865 = vmatprep.subr.mxu0 0.0
    %866 = vmatpush1.msra.mxu0 0.0
    %867 = vmatprep.subr.mxu0 0.0
    %868 = vmatpush1.msra.mxu0 0.0
    %869 = vmatprep.subr.mxu0 0.0
    %870 = vmatpush1.msra.mxu0 0.0
    %871 = vmatprep.subr.mxu0 0.0
    %872 = vmatpush1.msra.mxu0 0.0
    %873 = vmatprep.subr.mxu0 0.0
    %874 = vmatpush1.msra.mxu0 0.0
    %875 = vmatprep.subr.mxu0 0.0
    %876 = vmatpush1.msra.mxu0 0.0
    %877 = vmatprep.subr.mxu0 0.0
    %878 = vmatpush1.msra.mxu0 0.0
    %879 = vmatprep.subr.mxu0 0.0
    %880 = vmatpush1.msra.mxu0 0.0
    %881 = vmatprep.subr.mxu0 0.0
    %882 = vmatpush1.msra.mxu0 0.0
    %883 = vmatprep.mubr.f32.mxu0 0.0
    %884 = vmatmul.mubr.f32.gmra.mrb[0].mxu0 %v817
    %v885 = vpop.f32.mrb[0].mxu0
    %v886 = vadd.f32 0.0, %v885
    %v887 = vpop.f32.mrb[0].mxu0
    %888 = vdwg.mxu0
    %v889 = vld [vmem:[#allocation2 + $0x2f0] sm:$0xff]
    %v890 = vld [vmem:[#allocation2 + $0x300] sm:$0xff]
    %v891 = vld [vmem:[#allocation2 + $0x310] sm:$0xff]
    %v892 = vld [vmem:[#allocation2 + $0x320] sm:$0xff]
    %vm893 = vcmask 261120
    %v895 = vsel %vm893, %v886, 0
    %897 = vmatprep.subr.mxu0 0.0
    %898 = vmatpush1.msra.mxu0 %v889
    %899 = vmatprep.subr.mxu0 0.0
    %900 = vmatpush1.msra.mxu0 %v890
    %901 = vmatprep.subr.mxu0 0.0
    %902 = vmatpush1.msra.mxu0 %v891
    %903 = vmatprep.subr.mxu0 0.0
    %904 = vmatpush1.msra.mxu0 %v892
    %905 = vmatprep.subr.mxu0 0.0
    %906 = vmatpush1.msra.mxu0 0.0
    %907 = vmatprep.subr.mxu0 0.0
    %908 = vmatpush1.msra.mxu0 0.0
    %909 = vmatprep.subr.mxu0 0.0
    %910 = vmatpush1.msra.mxu0 0.0
    %911 = vmatprep.subr.mxu0 0.0
    %912 = vmatpush1.msra.mxu0 0.0
    %913 = vmatprep.subr.mxu0 0.0
    %914 = vmatpush1.msra.mxu0 0.0
    %915 = vmatprep.subr.mxu0 0.0
    %916 = vmatpush1.msra.mxu0 0.0
    %917 = vmatprep.subr.mxu0 0.0
    %918 = vmatpush1.msra.mxu0 0.0
    %919 = vmatprep.subr.mxu0 0.0
    %920 = vmatpush1.msra.mxu0 0.0
    %921 = vmatprep.subr.mxu0 0.0
    %922 = vmatpush1.msra.mxu0 0.0
    %923 = vmatprep.subr.mxu0 0.0
    %924 = vmatpush1.msra.mxu0 0.0
    %925 = vmatprep.subr.mxu0 0.0
    %926 = vmatpush1.msra.mxu0 0.0
    %927 = vmatprep.subr.mxu0 0.0
    %928 = vmatpush1.msra.mxu0 0.0
    %929 = vmatprep.subr.mxu0 0.0
    %930 = vmatpush1.msra.mxu0 0.0
    %931 = vmatprep.subr.mxu0 0.0
    %932 = vmatpush1.msra.mxu0 0.0
    %933 = vmatprep.subr.mxu0 0.0
    %934 = vmatpush1.msra.mxu0 0.0
    %935 = vmatprep.subr.mxu0 0.0
    %936 = vmatpush1.msra.mxu0 0.0
    %937 = vmatprep.subr.mxu0 0.0
    %938 = vmatpush1.msra.mxu0 0.0
    %939 = vmatprep.subr.mxu0 0.0
    %940 = vmatpush1.msra.mxu0 0.0
    %941 = vmatprep.subr.mxu0 0.0
    %942 = vmatpush1.msra.mxu0 0.0
    %943 = vmatprep.subr.mxu0 0.0
    %944 = vmatpush1.msra.mxu0 0.0
    %945 = vmatprep.subr.mxu0 0.0
    %946 = vmatpush1.msra.mxu0 0.0
    %947 = vmatprep.subr.mxu0 0.0
    %948 = vmatpush1.msra.mxu0 0.0
    %949 = vmatprep.subr.mxu0 0.0
    %950 = vmatpush1.msra.mxu0 0.0
    %951 = vmatprep.subr.mxu0 0.0
    %952 = vmatpush1.msra.mxu0 0.0
    %953 = vmatprep.subr.mxu0 0.0
    %954 = vmatpush1.msra.mxu0 0.0
    %955 = vmatprep.subr.mxu0 0.0
    %956 = vmatpush1.msra.mxu0 0.0
    %957 = vmatprep.subr.mxu0 0.0
    %958 = vmatpush1.msra.mxu0 0.0
    %959 = vmatprep.subr.mxu0 0.0
    %960 = vmatpush1.msra.mxu0 0.0
    %961 = vmatprep.mubr.f32.mxu0 0.0
    %962 = vmatmul.mubr.f32.gmra.mrb[0].mxu0 %v895
    %v963 = vpop.f32.mrb[0].mxu0
    %v964 = vadd.f32 0.0, %v963
    %v965 = vpop.f32.mrb[0].mxu0
    %966 = vdwg.mxu0
    %v968 = vsel %vm175, %v53, 0
    %v971 = vsel %vm175, %v54, 0
    %973 = vmatprep.subr.mxu0 0.0
    %974 = vmatpush1.msra.mxu0 %v964
    %975 = vmatprep.subr.mxu0 0.0
    %976 = vmatpush1.msra.mxu0 0.0
    %977 = vmatprep.subr.mxu0 0.0
    %978 = vmatpush1.msra.mxu0 0.0
    %979 = vmatprep.subr.mxu0 0.0
    %980 = vmatpush1.msra.mxu0 0.0
    %981 = vmatprep.subr.mxu0 0.0
    %982 = vmatpush1.msra.mxu0 0.0
    %983 = vmatprep.subr.mxu0 0.0
    %984 = vmatpush1.msra.mxu0 0.0
    %985 = vmatprep.subr.mxu0 0.0
    %986 = vmatpush1.msra.mxu0 0.0
    %987 = vmatprep.subr.mxu0 0.0
    %988 = vmatpush1.msra.mxu0 0.0
    %989 = vmatprep.subr.mxu0 0.0
    %990 = vmatpush1.msra.mxu0 0.0
    %991 = vmatprep.subr.mxu0 0.0
    %992 = vmatpush1.msra.mxu0 0.0
    %993 = vmatprep.subr.mxu0 0.0
    %994 = vmatpush1.msra.mxu0 0.0
    %995 = vmatprep.subr.mxu0 0.0
    %996 = vmatpush1.msra.mxu0 0.0
    %997 = vmatprep.subr.mxu0 0.0
    %998 = vmatpush1.msra.mxu0 0.0
    %999 = vmatprep.subr.mxu0 0.0
    %1000 = vmatpush1.msra.mxu0 0.0
    %1001 = vmatprep.subr.mxu0 0.0
    %1002 = vmatpush1.msra.mxu0 0.0
    %1003 = vmatprep.subr.mxu0 0.0
    %1004 = vmatpush1.msra.mxu0 0.0
    %1005 = vmatprep.subr.mxu0 0.0
    %1006 = vmatpush1.msra.mxu0 0.0
    %1007 = vmatprep.subr.mxu0 0.0
    %1008 = vmatpush1.msra.mxu0 0.0
    %1009 = vmatprep.subr.mxu0 0.0
    %1010 = vmatpush1.msra.mxu0 0.0
    %1011 = vmatprep.subr.mxu0 0.0
    %1012 = vmatpush1.msra.mxu0 0.0
    %1013 = vmatprep.subr.mxu0 0.0
    %1014 = vmatpush1.msra.mxu0 0.0
    %1015 = vmatprep.subr.mxu0 0.0
    %1016 = vmatpush1.msra.mxu0 0.0
    %1017 = vmatprep.subr.mxu0 0.0
    %1018 = vmatpush1.msra.mxu0 0.0
    %1019 = vmatprep.subr.mxu0 0.0
    %1020 = vmatpush1.msra.mxu0 0.0
    %1021 = vmatprep.subr.mxu0 0.0
    %1022 = vmatpush1.msra.mxu0 0.0
    %1023 = vmatprep.subr.mxu0 0.0
    %1024 = vmatpush1.msra.mxu0 0.0
    %1025 = vmatprep.subr.mxu0 0.0
    %1026 = vmatpush1.msra.mxu0 0.0
    %1027 = vmatprep.subr.mxu0 0.0
    %1028 = vmatpush1.msra.mxu0 0.0
    %1029 = vmatprep.subr.mxu0 0.0
    %1030 = vmatpush1.msra.mxu0 0.0
    %1031 = vmatprep.subr.mxu0 0.0
    %1032 = vmatpush1.msra.mxu0 0.0
    %1033 = vmatprep.subr.mxu0 0.0
    %1034 = vmatpush1.msra.mxu0 0.0
    %1035 = vmatprep.subr.mxu0 0.0
    %1036 = vmatpush1.msra.mxu0 0.0
    %1037 = vmatprep.mubr.f32.mxu0 0.0
    %1038 = vmatmul.mubr.f32.gmra.mrb[0].mxu0 %v968
    %v1039 = vpop.f32.mrb[0].mxu0
    %v1040 = vadd.f32 0.0, %v1039
    %v1041 = vpop.f32.mrb[0].mxu0
    %1042 = vmatprep.mubr.f32.mxu0 0.0
    %1043 = vmatmul.mubr.f32.gmra.mrb[0].mxu0 %v971
    %v1044 = vpop.f32.mrb[0].mxu0
    %v1045 = vadd.f32 0.0, %v1044
    %v1046 = vpop.f32.mrb[0].mxu0
    %1047 = vdwg.mxu0
    %v1048 = vmul.f32 %v1040, %v798
    %v1049 = vmul.f32 %v1045, %v800
    %vm1050 = vcmask 97280
    %v1052 = vsel %vm1050, %v75, 0
    %vm1054 = vcmask 1043456
    %v1056 = vsel %vm1054, %v1049, 0
    %1058 = vmatprep.subr.mxu0 0.0
    %1059 = vmatpush1.msra.mxu0 %v1048
    %1060 = vmatprep.subr.mxu0 0.0
    %1061 = vmatpush1.msra.mxu0 %v1056
    %1062 = vmatprep.subr.mxu0 0.0
    %1063 = vmatpush1.msra.mxu0 0.0
    %1064 = vmatprep.subr.mxu0 0.0
    %1065 = vmatpush1.msra.mxu0 0.0
    %1066 = vmatprep.subr.mxu0 0.0
    %1067 = vmatpush1.msra.mxu0 0.0
    %1068 = vmatprep.subr.mxu0 0.0
    %1069 = vmatpush1.msra.mxu0 0.0
    %1070 = vmatprep.subr.mxu0 0.0
    %1071 = vmatpush1.msra.mxu0 0.0
    %1072 = vmatprep.subr.mxu0 0.0
    %1073 = vmatpush1.msra.mxu0 0.0
    %1074 = vmatprep.subr.mxu0 0.0
    %1075 = vmatpush1.msra.mxu0 0.0
    %1076 = vmatprep.subr.mxu0 0.0
    %1077 = vmatpush1.msra.mxu0 0.0
    %1078 = vmatprep.subr.mxu0 0.0
    %1079 = vmatpush1.msra.mxu0 0.0
    %1080 = vmatprep.subr.mxu0 0.0
    %1081 = vmatpush1.msra.mxu0 0.0
    %1082 = vmatprep.subr.mxu0 0.0
    %1083 = vmatpush1.msra.mxu0 0.0
    %1084 = vmatprep.subr.mxu0 0.0
    %1085 = vmatpush1.msra.mxu0 0.0
    %1086 = vmatprep.subr.mxu0 0.0
    %1087 = vmatpush1.msra.mxu0 0.0
    %1088 = vmatprep.subr.mxu0 0.0
    %1089 = vmatpush1.msra.mxu0 0.0
    %1090 = vmatprep.subr.mxu0 0.0
    %1091 = vmatpush1.msra.mxu0 0.0
    %1092 = vmatprep.subr.mxu0 0.0
    %1093 = vmatpush1.msra.mxu0 0.0
    %1094 = vmatprep.subr.mxu0 0.0
    %1095 = vmatpush1.msra.mxu0 0.0
    %1096 = vmatprep.subr.mxu0 0.0
    %1097 = vmatpush1.msra.mxu0 0.0
    %1098 = vmatprep.subr.mxu0 0.0
    %1099 = vmatpush1.msra.mxu0 0.0
    %1100 = vmatprep.subr.mxu0 0.0
    %1101 = vmatpush1.msra.mxu0 0.0
    %1102 = vmatprep.subr.mxu0 0.0
    %1103 = vmatpush1.msra.mxu0 0.0
    %1104 = vmatprep.subr.mxu0 0.0
    %1105 = vmatpush1.msra.mxu0 0.0
    %1106 = vmatprep.subr.mxu0 0.0
    %1107 = vmatpush1.msra.mxu0 0.0
    %1108 = vmatprep.subr.mxu0 0.0
    %1109 = vmatpush1.msra.mxu0 0.0
    %1110 = vmatprep.subr.mxu0 0.0
    %1111 = vmatpush1.msra.mxu0 0.0
    %1112 = vmatprep.subr.mxu0 0.0
    %1113 = vmatpush1.msra.mxu0 0.0
    %1114 = vmatprep.subr.mxu0 0.0
    %1115 = vmatpush1.msra.mxu0 0.0
    %1116 = vmatprep.subr.mxu0 0.0
    %1117 = vmatpush1.msra.mxu0 0.0
    %1118 = vmatprep.subr.mxu0 0.0
    %1119 = vmatpush1.msra.mxu0 0.0
    %1120 = vmatprep.subr.mxu0 0.0
    %1121 = vmatpush1.msra.mxu0 0.0
    %1122 = vmatprep.mubr.f32.mxu0 0.0
    %1123 = vmatmul.mubr.f32.gmra.mrb[0].mxu0 %v1052
    %v1124 = vpop.f32.mrb[0].mxu0
    %v1125 = vadd.f32 0.0, %v1124
    %v1126 = vpop.f32.mrb[0].mxu0
    %1127 = vdwg.mxu0
    %v1128 = vld [vmem:[#allocation2 + $0x370] sm:$0xff]
    %v1129 = vld [vmem:[#allocation2 + $0x380] sm:$0xff]
    %v1130 = vld [vmem:[#allocation2 + $0x390] sm:$0xff]
    %v1131 = vld [vmem:[#allocation2 + $0x3a0] sm:$0xff]
    %v1132 = vld [vmem:[#allocation2 + $0x3b0] sm:$0xff]
    %v1133 = vld [vmem:[#allocation2 + $0x3c0] sm:$0xff]
    %v1134 = vld [vmem:[#allocation2 + $0x3d0] sm:$0xff]
    %v1135 = vld [vmem:[#allocation2 + $0x3e0] sm:$0xff]
    %v1136 = vld [vmem:[#allocation2 + $0x3f0] sm:$0xff]
    %v1137 = vld [vmem:[#allocation2 + $0x400] sm:$0xff]
    %v1138 = vld [vmem:[#allocation2 + $0x410] sm:$0xff]
    %v1139 = vld [vmem:[#allocation2 + $0x420] sm:$0xff]
    %v1140 = vld [vmem:[#allocation2 + $0x430] sm:$0xff]
    %v1141 = vld [vmem:[#allocation2 + $0x440] sm:$0xff]
    %v1142 = vld [vmem:[#allocation2 + $0x450] sm:$0xff]
    %v1143 = vld [vmem:[#allocation2 + $0x460] sm:$0xff]
    %v1144 = vld [vmem:[%s1 + $0x2] ss:$0 sm:$0xff]
    %1145 = vmatprep.subr.mxu0 0.0
    %1146 = vmatpush1.msra.mxu0 %v1128
    %1147 = vmatprep.subr.mxu0 0.0
    %1148 = vmatpush1.msra.mxu0 %v1129
    %1149 = vmatprep.subr.mxu0 0.0
    %1150 = vmatpush1.msra.mxu0 %v1130
    %1151 = vmatprep.subr.mxu0 0.0
    %1152 = vmatpush1.msra.mxu0 %v1131
    %1153 = vmatprep.subr.mxu0 0.0
    %1154 = vmatpush1.msra.mxu0 %v1132
    %1155 = vmatprep.subr.mxu0 0.0
    %1156 = vmatpush1.msra.mxu0 %v1133
    %1157 = vmatprep.subr.mxu0 0.0
    %1158 = vmatpush1.msra.mxu0 %v1134
    %1159 = vmatprep.subr.mxu0 0.0
    %1160 = vmatpush1.msra.mxu0 %v1135
    %1161 = vmatprep.subr.mxu0 0.0
    %1162 = vmatpush1.msra.mxu0 %v1136
    %1163 = vmatprep.subr.mxu0 0.0
    %1164 = vmatpush1.msra.mxu0 %v1137
    %1165 = vmatprep.subr.mxu0 0.0
    %1166 = vmatpush1.msra.mxu0 %v1138
    %1167 = vmatprep.subr.mxu0 0.0
    %1168 = vmatpush1.msra.mxu0 %v1139
    %1169 = vmatprep.subr.mxu0 0.0
    %1170 = vmatpush1.msra.mxu0 %v1140
    %1171 = vmatprep.subr.mxu0 0.0
    %1172 = vmatpush1.msra.mxu0 %v1141
    %1173 = vmatprep.subr.mxu0 0.0
    %1174 = vmatpush1.msra.mxu0 %v1142
    %1175 = vmatprep.subr.mxu0 0.0
    %1176 = vmatpush1.msra.mxu0 %v1143
    %1177 = vmatprep.subr.mxu0 0.0
    %1178 = vmatpush1.msra.mxu0 0.0
    %1179 = vmatprep.subr.mxu0 0.0
    %1180 = vmatpush1.msra.mxu0 0.0
    %1181 = vmatprep.subr.mxu0 0.0
    %1182 = vmatpush1.msra.mxu0 0.0
    %1183 = vmatprep.subr.mxu0 0.0
    %1184 = vmatpush1.msra.mxu0 0.0
    %1185 = vmatprep.subr.mxu0 0.0
    %1186 = vmatpush1.msra.mxu0 0.0
    %1187 = vmatprep.subr.mxu0 0.0
    %1188 = vmatpush1.msra.mxu0 0.0
    %1189 = vmatprep.subr.mxu0 0.0
    %1190 = vmatpush1.msra.mxu0 0.0
    %1191 = vmatprep.subr.mxu0 0.0
    %1192 = vmatpush1.msra.mxu0 0.0
    %1193 = vmatprep.subr.mxu0 0.0
    %1194 = vmatpush1.msra.mxu0 0.0
    %1195 = vmatprep.subr.mxu0 0.0
    %1196 = vmatpush1.msra.mxu0 0.0
    %1197 = vmatprep.subr.mxu0 0.0
    %1198 = vmatpush1.msra.mxu0 0.0
    %1199 = vmatprep.subr.mxu0 0.0
    %1200 = vmatpush1.msra.mxu0 0.0
    %1201 = vmatprep.subr.mxu0 0.0
    %1202 = vmatpush1.msra.mxu0 0.0
    %1203 = vmatprep.subr.mxu0 0.0
    %1204 = vmatpush1.msra.mxu0 0.0
    %1205 = vmatprep.subr.mxu0 0.0
    %1206 = vmatpush1.msra.mxu0 0.0
    %1207 = vmatprep.subr.mxu0 0.0
    %1208 = vmatpush1.msra.mxu0 0.0
    %1209 = vmatprep.mubr.f32.mxu0 0.0
    %1210 = vmatmul.mubr.f32.gmra.mrb[0].mxu0 %v1125
    %v1211 = vpop.f32.mrb[0].mxu0
    %v1212 = vadd.f32 %v1144, %v1211
    %v1213 = vpop.f32.mrb[0].mxu0
    %1214 = vdwg.mxu0
    %v1215 = vmax.f32 %v1212, 0.0
    %v1216 = vand.u32 2147483647, %v1212
    %v1217 = vsub.f32 0.0, %v1216
    %v1218 = vmul.f32 %v1217, 1.442695
    %v1219 = vpow.pop %v1218
    %v1220 = vadd.f32 %v1219, 1.0
    %v1221 = vlog2.pop %v1220
    %v1222 = vmul.f32 %v1221, 0.6931472
    %v1223 = vadd.f32 %v1215, %v1222
    %v1224 = vsub.f32 %v1223, 0.6931472
    %v1225 = vld [vmem:[#allocation2 + $0x330] sm:$0xff]
    %v1226 = vld [vmem:[#allocation2 + $0x340] sm:$0xff]
    %v1227 = vld [vmem:[#allocation2 + $0x350] sm:$0xff]
    %v1228 = vld [vmem:[#allocation2 + $0x360] sm:$0xff]
    %v1229 = vld [vmem:[#allocation2 + $0x5f0] sm:$0xff]
    %v1230 = vld [vmem:[#allocation2 + $0x600] sm:$0xff]
    %v1231 = vld [vmem:[#allocation2 + $0x610] sm:$0xff]
    %v1232 = vld [vmem:[#allocation2 + $0x620] sm:$0xff]
    %v1234 = vsel %vm893, %v1224, 0
    %1236 = vmatprep.subr.mxu0 0.0
    %1237 = vmatpush1.msra.mxu0 %v1229
    %1238 = vmatprep.subr.mxu0 0.0
    %1239 = vmatpush1.msra.mxu0 %v1230
    %1240 = vmatprep.subr.mxu0 0.0
    %1241 = vmatpush1.msra.mxu0 %v1231
    %1242 = vmatprep.subr.mxu0 0.0
    %1243 = vmatpush1.msra.mxu0 %v1232
    %1244 = vmatprep.subr.mxu0 0.0
    %1245 = vmatpush1.msra.mxu0 0.0
    %1246 = vmatprep.subr.mxu0 0.0
    %1247 = vmatpush1.msra.mxu0 0.0
    %1248 = vmatprep.subr.mxu0 0.0
    %1249 = vmatpush1.msra.mxu0 0.0
    %1250 = vmatprep.subr.mxu0 0.0
    %1251 = vmatpush1.msra.mxu0 0.0
    %1252 = vmatprep.subr.mxu0 0.0
    %1253 = vmatpush1.msra.mxu0 0.0
    %1254 = vmatprep.subr.mxu0 0.0
    %1255 = vmatpush1.msra.mxu0 0.0
    %1256 = vmatprep.subr.mxu0 0.0
    %1257 = vmatpush1.msra.mxu0 0.0
    %1258 = vmatprep.subr.mxu0 0.0
    %1259 = vmatpush1.msra.mxu0 0.0
    %1260 = vmatprep.subr.mxu0 0.0
    %1261 = vmatpush1.msra.mxu0 0.0
    %1262 = vmatprep.subr.mxu0 0.0
    %1263 = vmatpush1.msra.mxu0 0.0
    %1264 = vmatprep.subr.mxu0 0.0
    %1265 = vmatpush1.msra.mxu0 0.0
    %1266 = vmatprep.subr.mxu0 0.0
    %1267 = vmatpush1.msra.mxu0 0.0
    %1268 = vmatprep.subr.mxu0 0.0
    %1269 = vmatpush1.msra.mxu0 0.0
    %1270 = vmatprep.subr.mxu0 0.0
    %1271 = vmatpush1.msra.mxu0 0.0
    %1272 = vmatprep.subr.mxu0 0.0
    %1273 = vmatpush1.msra.mxu0 0.0
    %1274 = vmatprep.subr.mxu0 0.0
    %1275 = vmatpush1.msra.mxu0 0.0
    %1276 = vmatprep.subr.mxu0 0.0
    %1277 = vmatpush1.msra.mxu0 0.0
    %1278 = vmatprep.subr.mxu0 0.0
    %1279 = vmatpush1.msra.mxu0 0.0
    %1280 = vmatprep.subr.mxu0 0.0
    %1281 = vmatpush1.msra.mxu0 0.0
    %1282 = vmatprep.subr.mxu0 0.0
    %1283 = vmatpush1.msra.mxu0 0.0
    %1284 = vmatprep.subr.mxu0 0.0
    %1285 = vmatpush1.msra.mxu0 0.0
    %1286 = vmatprep.subr.mxu0 0.0
    %1287 = vmatpush1.msra.mxu0 0.0
    %1288 = vmatprep.subr.mxu0 0.0
    %1289 = vmatpush1.msra.mxu0 0.0
    %1290 = vmatprep.subr.mxu0 0.0
    %1291 = vmatpush1.msra.mxu0 0.0
    %1292 = vmatprep.subr.mxu0 0.0
    %1293 = vmatpush1.msra.mxu0 0.0
    %1294 = vmatprep.subr.mxu0 0.0
    %1295 = vmatpush1.msra.mxu0 0.0
    %1296 = vmatprep.subr.mxu0 0.0
    %1297 = vmatpush1.msra.mxu0 0.0
    %1298 = vmatprep.subr.mxu0 0.0
    %1299 = vmatpush1.msra.mxu0 0.0
    %1300 = vmatprep.mubr.f32.mxu0 0.0
    %1301 = vmatmul.mubr.f32.gmra.mrb[0].mxu0 %v1234
    %v1302 = vpop.f32.mrb[0].mxu0
    %v1303 = vadd.f32 0.0, %v1302
    %v1304 = vpop.f32.mrb[0].mxu0
    %1305 = vdwg.mxu0
    %1306 = vmatprep.subr.mxu0 0.0
    %1307 = vmatpush1.msra.mxu0 %v1225
    %1308 = vmatprep.subr.mxu0 0.0
    %1309 = vmatpush1.msra.mxu0 %v1226
    %1310 = vmatprep.subr.mxu0 0.0
    %1311 = vmatpush1.msra.mxu0 %v1227
    %1312 = vmatprep.subr.mxu0 0.0
    %1313 = vmatpush1.msra.mxu0 %v1228
    %1314 = vmatprep.subr.mxu0 0.0
    %1315 = vmatpush1.msra.mxu0 0.0
    %1316 = vmatprep.subr.mxu0 0.0
    %1317 = vmatpush1.msra.mxu0 0.0
    %1318 = vmatprep.subr.mxu0 0.0
    %1319 = vmatpush1.msra.mxu0 0.0
    %1320 = vmatprep.subr.mxu0 0.0
    %1321 = vmatpush1.msra.mxu0 0.0
    %1322 = vmatprep.subr.mxu0 0.0
    %1323 = vmatpush1.msra.mxu0 0.0
    %1324 = vmatprep.subr.mxu0 0.0
    %1325 = vmatpush1.msra.mxu0 0.0
    %1326 = vmatprep.subr.mxu0 0.0
    %1327 = vmatpush1.msra.mxu0 0.0
    %1328 = vmatprep.subr.mxu0 0.0
    %1329 = vmatpush1.msra.mxu0 0.0
    %1330 = vmatprep.subr.mxu0 0.0
    %1331 = vmatpush1.msra.mxu0 0.0
    %1332 = vmatprep.subr.mxu0 0.0
    %1333 = vmatpush1.msra.mxu0 0.0
    %1334 = vmatprep.subr.mxu0 0.0
    %1335 = vmatpush1.msra.mxu0 0.0
    %1336 = vmatprep.subr.mxu0 0.0
    %1337 = vmatpush1.msra.mxu0 0.0
    %1338 = vmatprep.subr.mxu0 0.0
    %1339 = vmatpush1.msra.mxu0 0.0
    %1340 = vmatprep.subr.mxu0 0.0
    %1341 = vmatpush1.msra.mxu0 0.0
    %1342 = vmatprep.subr.mxu0 0.0
    %1343 = vmatpush1.msra.mxu0 0.0
    %1344 = vmatprep.subr.mxu0 0.0
    %1345 = vmatpush1.msra.mxu0 0.0
    %1346 = vmatprep.subr.mxu0 0.0
    %1347 = vmatpush1.msra.mxu0 0.0
    %1348 = vmatprep.subr.mxu0 0.0
    %1349 = vmatpush1.msra.mxu0 0.0
    %1350 = vmatprep.subr.mxu0 0.0
    %1351 = vmatpush1.msra.mxu0 0.0
    %1352 = vmatprep.subr.mxu0 0.0
    %1353 = vmatpush1.msra.mxu0 0.0
    %1354 = vmatprep.subr.mxu0 0.0
    %1355 = vmatpush1.msra.mxu0 0.0
    %1356 = vmatprep.subr.mxu0 0.0
    %1357 = vmatpush1.msra.mxu0 0.0
    %1358 = vmatprep.subr.mxu0 0.0
    %1359 = vmatpush1.msra.mxu0 0.0
    %1360 = vmatprep.subr.mxu0 0.0
    %1361 = vmatpush1.msra.mxu0 0.0
    %1362 = vmatprep.subr.mxu0 0.0
    %1363 = vmatpush1.msra.mxu0 0.0
    %1364 = vmatprep.subr.mxu0 0.0
    %1365 = vmatpush1.msra.mxu0 0.0
    %1366 = vmatprep.subr.mxu0 0.0
    %1367 = vmatpush1.msra.mxu0 0.0
    %1368 = vmatprep.subr.mxu0 0.0
    %1369 = vmatpush1.msra.mxu0 0.0
    %1370 = vmatprep.mubr.f32.mxu0 0.0
    %1371 = vmatmul.mubr.f32.gmra.mrb[0].mxu0 %v895
    %v1372 = vpop.f32.mrb[0].mxu0
    %v1373 = vadd.f32 %v1303, %v1372
    %v1374 = vpop.f32.mrb[0].mxu0
    %1375 = vdwg.mxu0
    %v1376 = vld [vmem:[%s1 + $0x6] ss:$0 sm:$0xff]
    %v1377 = vadd.f32 %v1373, %v1376
    %v1378 = vld [vmem:[#allocation2 + $0x570] sm:$0xff]
    %v1379 = vld [vmem:[#allocation2 + $0x580] sm:$0xff]
    %v1380 = vld [vmem:[#allocation2 + $0x590] sm:$0xff]
    %v1381 = vld [vmem:[#allocation2 + $0x5a0] sm:$0xff]
    %1382 = vmatprep.subr.mxu0 0.0
    %1383 = vmatpush1.msra.mxu0 %v1378
    %1384 = vmatprep.subr.mxu0 0.0
    %1385 = vmatpush1.msra.mxu0 %v1379
    %1386 = vmatprep.subr.mxu0 0.0
    %1387 = vmatpush1.msra.mxu0 %v1380
    %1388 = vmatprep.subr.mxu0 0.0
    %1389 = vmatpush1.msra.mxu0 %v1381
    %1390 = vmatprep.subr.mxu0 0.0
    %1391 = vmatpush1.msra.mxu0 0.0
    %1392 = vmatprep.subr.mxu0 0.0
    %1393 = vmatpush1.msra.mxu0 0.0
    %1394 = vmatprep.subr.mxu0 0.0
    %1395 = vmatpush1.msra.mxu0 0.0
    %1396 = vmatprep.subr.mxu0 0.0
    %1397 = vmatpush1.msra.mxu0 0.0
    %1398 = vmatprep.subr.mxu0 0.0
    %1399 = vmatpush1.msra.mxu0 0.0
    %1400 = vmatprep.subr.mxu0 0.0
    %1401 = vmatpush1.msra.mxu0 0.0
    %1402 = vmatprep.subr.mxu0 0.0
    %1403 = vmatpush1.msra.mxu0 0.0
    %1404 = vmatprep.subr.mxu0 0.0
    %1405 = vmatpush1.msra.mxu0 0.0
    %1406 = vmatprep.subr.mxu0 0.0
    %1407 = vmatpush1.msra.mxu0 0.0
    %1408 = vmatprep.subr.mxu0 0.0
    %1409 = vmatpush1.msra.mxu0 0.0
    %1410 = vmatprep.subr.mxu0 0.0
    %1411 = vmatpush1.msra.mxu0 0.0
    %1412 = vmatprep.subr.mxu0 0.0
    %1413 = vmatpush1.msra.mxu0 0.0
    %1414 = vmatprep.subr.mxu0 0.0
    %1415 = vmatpush1.msra.mxu0 0.0
    %1416 = vmatprep.subr.mxu0 0.0
    %1417 = vmatpush1.msra.mxu0 0.0
    %1418 = vmatprep.subr.mxu0 0.0
    %1419 = vmatpush1.msra.mxu0 0.0
    %1420 = vmatprep.subr.mxu0 0.0
    %1421 = vmatpush1.msra.mxu0 0.0
    %1422 = vmatprep.subr.mxu0 0.0
    %1423 = vmatpush1.msra.mxu0 0.0
    %1424 = vmatprep.subr.mxu0 0.0
    %1425 = vmatpush1.msra.mxu0 0.0
    %1426 = vmatprep.subr.mxu0 0.0
    %1427 = vmatpush1.msra.mxu0 0.0
    %1428 = vmatprep.subr.mxu0 0.0
    %1429 = vmatpush1.msra.mxu0 0.0
    %1430 = vmatprep.subr.mxu0 0.0
    %1431 = vmatpush1.msra.mxu0 0.0
    %1432 = vmatprep.subr.mxu0 0.0
    %1433 = vmatpush1.msra.mxu0 0.0
    %1434 = vmatprep.subr.mxu0 0.0
    %1435 = vmatpush1.msra.mxu0 0.0
    %1436 = vmatprep.subr.mxu0 0.0
    %1437 = vmatpush1.msra.mxu0 0.0
    %1438 = vmatprep.subr.mxu0 0.0
    %1439 = vmatpush1.msra.mxu0 0.0
    %1440 = vmatprep.subr.mxu0 0.0
    %1441 = vmatpush1.msra.mxu0 0.0
    %1442 = vmatprep.subr.mxu0 0.0
    %1443 = vmatpush1.msra.mxu0 0.0
    %1444 = vmatprep.subr.mxu0 0.0
    %1445 = vmatpush1.msra.mxu0 0.0
    %1446 = vmatprep.mubr.f32.mxu0 0.0
    %1447 = vmatmul.mubr.f32.gmra.mrb[0].mxu0 %v1234
    %v1448 = vpop.f32.mrb[0].mxu0
    %v1449 = vadd.f32 0.0, %v1448
    %v1450 = vpop.f32.mrb[0].mxu0
    %1451 = vdwg.mxu0
    %v1452 = vadd.f32 %v886, %v1449
    %v1453 = vld [vmem:[%s1 + $0x4] ss:$0 sm:$0xff]
    %v1454 = vadd.f32 %v1452, %v1453
    %1455 = vmatprep.subr.mxu0 0.0
    %1456 = vmatpush1.msra.mxu0 %v1377
    %1457 = vmatprep.subr.mxu0 0.0
    %1458 = vmatpush1.msra.mxu0 0.0
    %1459 = vmatprep.subr.mxu0 0.0
    %1460 = vmatpush1.msra.mxu0 0.0
    %1461 = vmatprep.subr.mxu0 0.0
    %1462 = vmatpush1.msra.mxu0 0.0
    %1463 = vmatprep.subr.mxu0 0.0
    %1464 = vmatpush1.msra.mxu0 0.0
    %1465 = vmatprep.subr.mxu0 0.0
    %1466 = vmatpush1.msra.mxu0 0.0
    %1467 = vmatprep.subr.mxu0 0.0
    %1468 = vmatpush1.msra.mxu0 0.0
    %1469 = vmatprep.subr.mxu0 0.0
    %1470 = vmatpush1.msra.mxu0 0.0
    %1471 = vmatprep.subr.mxu0 0.0
    %1472 = vmatpush1.msra.mxu0 0.0
    %1473 = vmatprep.subr.mxu0 0.0
    %1474 = vmatpush1.msra.mxu0 0.0
    %1475 = vmatprep.subr.mxu0 0.0
    %1476 = vmatpush1.msra.mxu0 0.0
    %1477 = vmatprep.subr.mxu0 0.0
    %1478 = vmatpush1.msra.mxu0 0.0
    %1479 = vmatprep.subr.mxu0 0.0
    %1480 = vmatpush1.msra.mxu0 0.0
    %1481 = vmatprep.subr.mxu0 0.0
    %1482 = vmatpush1.msra.mxu0 0.0
    %1483 = vmatprep.subr.mxu0 0.0
    %1484 = vmatpush1.msra.mxu0 0.0
    %1485 = vmatprep.subr.mxu0 0.0
    %1486 = vmatpush1.msra.mxu0 0.0
    %1487 = vmatprep.subr.mxu0 0.0
    %1488 = vmatpush1.msra.mxu0 0.0
    %1489 = vmatprep.subr.mxu0 0.0
    %1490 = vmatpush1.msra.mxu0 0.0
    %1491 = vmatprep.subr.mxu0 0.0
    %1492 = vmatpush1.msra.mxu0 0.0
    %1493 = vmatprep.subr.mxu0 0.0
    %1494 = vmatpush1.msra.mxu0 0.0
    %1495 = vmatprep.subr.mxu0 0.0
    %1496 = vmatpush1.msra.mxu0 0.0
    %1497 = vmatprep.subr.mxu0 0.0
    %1498 = vmatpush1.msra.mxu0 0.0
    %1499 = vmatprep.subr.mxu0 0.0
    %1500 = vmatpush1.msra.mxu0 0.0
    %1501 = vmatprep.subr.mxu0 0.0
    %1502 = vmatpush1.msra.mxu0 0.0
    %1503 = vmatprep.subr.mxu0 0.0
    %1504 = vmatpush1.msra.mxu0 0.0
    %1505 = vmatprep.subr.mxu0 0.0
    %1506 = vmatpush1.msra.mxu0 0.0
    %1507 = vmatprep.subr.mxu0 0.0
    %1508 = vmatpush1.msra.mxu0 0.0
    %1509 = vmatprep.subr.mxu0 0.0
    %1510 = vmatpush1.msra.mxu0 0.0
    %1511 = vmatprep.subr.mxu0 0.0
    %1512 = vmatpush1.msra.mxu0 0.0
    %1513 = vmatprep.subr.mxu0 0.0
    %1514 = vmatpush1.msra.mxu0 0.0
    %1515 = vmatprep.subr.mxu0 0.0
    %1516 = vmatpush1.msra.mxu0 0.0
    %1517 = vmatprep.subr.mxu0 0.0
    %1518 = vmatpush1.msra.mxu0 0.0
    %1519 = vmatprep.mubr.f32.mxu0 0.0
    %1520 = vmatmul.mubr.f32.gmra.mrb[0].mxu0 %v968
    %v1521 = vpop.f32.mrb[0].mxu0
    %v1522 = vadd.f32 0.0, %v1521
    %v1523 = vpop.f32.mrb[0].mxu0
    %1524 = vmatprep.mubr.f32.mxu0 0.0
    %1525 = vmatmul.mubr.f32.gmra.mrb[0].mxu0 %v971
    %v1526 = vpop.f32.mrb[0].mxu0
    %v1527 = vadd.f32 0.0, %v1526
    %v1528 = vpop.f32.mrb[0].mxu0
    %1529 = vdwg.mxu0
    %v1530 = vmul.f32 %v1522, %v799
    %v1531 = vmul.f32 %v1527, %v801
    %v1533 = vsel %vm1054, %v1531, 0
    %1535 = vmatprep.subr.mxu0 0.0
    %1536 = vmatpush1.msra.mxu0 %v1530
    %1537 = vmatprep.subr.mxu0 0.0
    %1538 = vmatpush1.msra.mxu0 %v1533
    %1539 = vmatprep.subr.mxu0 0.0
    %1540 = vmatpush1.msra.mxu0 0.0
    %1541 = vmatprep.subr.mxu0 0.0
    %1542 = vmatpush1.msra.mxu0 0.0
    %1543 = vmatprep.subr.mxu0 0.0
    %1544 = vmatpush1.msra.mxu0 0.0
    %1545 = vmatprep.subr.mxu0 0.0
    %1546 = vmatpush1.msra.mxu0 0.0
    %1547 = vmatprep.subr.mxu0 0.0
    %1548 = vmatpush1.msra.mxu0 0.0
    %1549 = vmatprep.subr.mxu0 0.0
    %1550 = vmatpush1.msra.mxu0 0.0
    %1551 = vmatprep.subr.mxu0 0.0
    %1552 = vmatpush1.msra.mxu0 0.0
    %1553 = vmatprep.subr.mxu0 0.0
    %1554 = vmatpush1.msra.mxu0 0.0
    %1555 = vmatprep.subr.mxu0 0.0
    %1556 = vmatpush1.msra.mxu0 0.0
    %1557 = vmatprep.subr.mxu0 0.0
    %1558 = vmatpush1.msra.mxu0 0.0
    %1559 = vmatprep.subr.mxu0 0.0
    %1560 = vmatpush1.msra.mxu0 0.0
    %1561 = vmatprep.subr.mxu0 0.0
    %1562 = vmatpush1.msra.mxu0 0.0
    %1563 = vmatprep.subr.mxu0 0.0
    %1564 = vmatpush1.msra.mxu0 0.0
    %1565 = vmatprep.subr.mxu0 0.0
    %1566 = vmatpush1.msra.mxu0 0.0
    %1567 = vmatprep.subr.mxu0 0.0
    %1568 = vmatpush1.msra.mxu0 0.0
    %1569 = vmatprep.subr.mxu0 0.0
    %1570 = vmatpush1.msra.mxu0 0.0
    %1571 = vmatprep.subr.mxu0 0.0
    %1572 = vmatpush1.msra.mxu0 0.0
    %1573 = vmatprep.subr.mxu0 0.0
    %1574 = vmatpush1.msra.mxu0 0.0
    %1575 = vmatprep.subr.mxu0 0.0
    %1576 = vmatpush1.msra.mxu0 0.0
    %1577 = vmatprep.subr.mxu0 0.0
    %1578 = vmatpush1.msra.mxu0 0.0
    %1579 = vmatprep.subr.mxu0 0.0
    %1580 = vmatpush1.msra.mxu0 0.0
    %1581 = vmatprep.subr.mxu0 0.0
    %1582 = vmatpush1.msra.mxu0 0.0
    %1583 = vmatprep.subr.mxu0 0.0
    %1584 = vmatpush1.msra.mxu0 0.0
    %1585 = vmatprep.subr.mxu0 0.0
    %1586 = vmatpush1.msra.mxu0 0.0
    %1587 = vmatprep.subr.mxu0 0.0
    %1588 = vmatpush1.msra.mxu0 0.0
    %1589 = vmatprep.subr.mxu0 0.0
    %1590 = vmatpush1.msra.mxu0 0.0
    %1591 = vmatprep.subr.mxu0 0.0
    %1592 = vmatpush1.msra.mxu0 0.0
    %1593 = vmatprep.subr.mxu0 0.0
    %1594 = vmatpush1.msra.mxu0 0.0
    %1595 = vmatprep.subr.mxu0 0.0
    %1596 = vmatpush1.msra.mxu0 0.0
    %1597 = vmatprep.subr.mxu0 0.0
    %1598 = vmatpush1.msra.mxu0 0.0
    %1599 = vmatprep.mubr.f32.mxu0 0.0
    %1600 = vmatmul.mubr.f32.gmra.mrb[0].mxu0 %v1052
    %v1601 = vpop.f32.mrb[0].mxu0
    %v1602 = vadd.f32 0.0, %v1601
    %v1603 = vpop.f32.mrb[0].mxu0
    %1604 = vdwg.mxu0
    %v1605 = vld [vmem:[#allocation2 + $0x470] sm:$0xff]
    %v1606 = vld [vmem:[#allocation2 + $0x480] sm:$0xff]
    %v1607 = vld [vmem:[#allocation2 + $0x490] sm:$0xff]
    %v1608 = vld [vmem:[#allocation2 + $0x4a0] sm:$0xff]
    %v1609 = vld [vmem:[#allocation2 + $0x4b0] sm:$0xff]
    %v1610 = vld [vmem:[#allocation2 + $0x4c0] sm:$0xff]
    %v1611 = vld [vmem:[#allocation2 + $0x4d0] sm:$0xff]
    %v1612 = vld [vmem:[#allocation2 + $0x4e0] sm:$0xff]
    %v1613 = vld [vmem:[#allocation2 + $0x4f0] sm:$0xff]
    %v1614 = vld [vmem:[#allocation2 + $0x500] sm:$0xff]
    %v1615 = vld [vmem:[#allocation2 + $0x510] sm:$0xff]
    %v1616 = vld [vmem:[#allocation2 + $0x520] sm:$0xff]
    %v1617 = vld [vmem:[#allocation2 + $0x530] sm:$0xff]
    %v1618 = vld [vmem:[#allocation2 + $0x540] sm:$0xff]
    %v1619 = vld [vmem:[#allocation2 + $0x550] sm:$0xff]
    %v1620 = vld [vmem:[#allocation2 + $0x560] sm:$0xff]
    %v1621 = vld [vmem:[%s1 + $0x3] ss:$0 sm:$0xff]
    %1622 = vmatprep.subr.mxu0 0.0
    %1623 = vmatpush1.msra.mxu0 %v1605
    %1624 = vmatprep.subr.mxu0 0.0
    %1625 = vmatpush1.msra.mxu0 %v1606
    %1626 = vmatprep.subr.mxu0 0.0
    %1627 = vmatpush1.msra.mxu0 %v1607
    %1628 = vmatprep.subr.mxu0 0.0
    %1629 = vmatpush1.msra.mxu0 %v1608
    %1630 = vmatprep.subr.mxu0 0.0
    %1631 = vmatpush1.msra.mxu0 %v1609
    %1632 = vmatprep.subr.mxu0 0.0
    %1633 = vmatpush1.msra.mxu0 %v1610
    %1634 = vmatprep.subr.mxu0 0.0
    %1635 = vmatpush1.msra.mxu0 %v1611
    %1636 = vmatprep.subr.mxu0 0.0
    %1637 = vmatpush1.msra.mxu0 %v1612
    %1638 = vmatprep.subr.mxu0 0.0
    %1639 = vmatpush1.msra.mxu0 %v1613
    %1640 = vmatprep.subr.mxu0 0.0
    %1641 = vmatpush1.msra.mxu0 %v1614
    %1642 = vmatprep.subr.mxu0 0.0
    %1643 = vmatpush1.msra.mxu0 %v1615
    %1644 = vmatprep.subr.mxu0 0.0
    %1645 = vmatpush1.msra.mxu0 %v1616
    %1646 = vmatprep.subr.mxu0 0.0
    %1647 = vmatpush1.msra.mxu0 %v1617
    %1648 = vmatprep.subr.mxu0 0.0
    %1649 = vmatpush1.msra.mxu0 %v1618
    %1650 = vmatprep.subr.mxu0 0.0
    %1651 = vmatpush1.msra.mxu0 %v1619
    %1652 = vmatprep.subr.mxu0 0.0
    %1653 = vmatpush1.msra.mxu0 %v1620
    %1654 = vmatprep.subr.mxu0 0.0
    %1655 = vmatpush1.msra.mxu0 0.0
    %1656 = vmatprep.subr.mxu0 0.0
    %1657 = vmatpush1.msra.mxu0 0.0
    %1658 = vmatprep.subr.mxu0 0.0
    %1659 = vmatpush1.msra.mxu0 0.0
    %1660 = vmatprep.subr.mxu0 0.0
    %1661 = vmatpush1.msra.mxu0 0.0
    %1662 = vmatprep.subr.mxu0 0.0
    %1663 = vmatpush1.msra.mxu0 0.0
    %1664 = vmatprep.subr.mxu0 0.0
    %1665 = vmatpush1.msra.mxu0 0.0
    %1666 = vmatprep.subr.mxu0 0.0
    %1667 = vmatpush1.msra.mxu0 0.0
    %1668 = vmatprep.subr.mxu0 0.0
    %1669 = vmatpush1.msra.mxu0 0.0
    %1670 = vmatprep.subr.mxu0 0.0
    %1671 = vmatpush1.msra.mxu0 0.0
    %1672 = vmatprep.subr.mxu0 0.0
    %1673 = vmatpush1.msra.mxu0 0.0
    %1674 = vmatprep.subr.mxu0 0.0
    %1675 = vmatpush1.msra.mxu0 0.0
    %1676 = vmatprep.subr.mxu0 0.0
    %1677 = vmatpush1.msra.mxu0 0.0
    %1678 = vmatprep.subr.mxu0 0.0
    %1679 = vmatpush1.msra.mxu0 0.0
    %1680 = vmatprep.subr.mxu0 0.0
    %1681 = vmatpush1.msra.mxu0 0.0
    %1682 = vmatprep.subr.mxu0 0.0
    %1683 = vmatpush1.msra.mxu0 0.0
    %1684 = vmatprep.subr.mxu0 0.0
    %1685 = vmatpush1.msra.mxu0 0.0
    %1686 = vmatprep.mubr.f32.mxu0 0.0
    %1687 = vmatmul.mubr.f32.gmra.mrb[0].mxu0 %v1602
    %v1688 = vpop.f32.mrb[0].mxu0
    %v1689 = vadd.f32 %v1621, %v1688
    %v1690 = vpop.f32.mrb[0].mxu0
    %1691 = vdwg.mxu0
    %v1692 = vmax.f32 %v1689, 0.0
    %v1693 = vand.u32 2147483647, %v1689
    %v1694 = vsub.f32 0.0, %v1693
    %v1695 = vmul.f32 %v1694, 1.442695
    %v1696 = vpow.pop %v1695
    %v1697 = vadd.f32 %v1696, 1.0
    %v1698 = vlog2.pop %v1697
    %v1699 = vmul.f32 %v1698, 0.6931472
    %v1700 = vadd.f32 %v1692, %v1699
    %v1701 = vsub.f32 %v1700, 0.6931472
    %v1702 = vld [vmem:[#allocation2 + $0x5b0] sm:$0xff]
    %v1703 = vld [vmem:[#allocation2 + $0x5c0] sm:$0xff]
    %v1704 = vld [vmem:[#allocation2 + $0x5d0] sm:$0xff]
    %v1705 = vld [vmem:[#allocation2 + $0x5e0] sm:$0xff]
    %v1707 = vsel %vm893, %v1701, 0
    %1709 = vmatprep.subr.mxu0 0.0
    %1710 = vmatpush1.msra.mxu0 %v1702
    %1711 = vmatprep.subr.mxu0 0.0
    %1712 = vmatpush1.msra.mxu0 %v1703
    %1713 = vmatprep.subr.mxu0 0.0
    %1714 = vmatpush1.msra.mxu0 %v1704
    %1715 = vmatprep.subr.mxu0 0.0
    %1716 = vmatpush1.msra.mxu0 %v1705
    %1717 = vmatprep.subr.mxu0 0.0
    %1718 = vmatpush1.msra.mxu0 0.0
    %1719 = vmatprep.subr.mxu0 0.0
    %1720 = vmatpush1.msra.mxu0 0.0
    %1721 = vmatprep.subr.mxu0 0.0
    %1722 = vmatpush1.msra.mxu0 0.0
    %1723 = vmatprep.subr.mxu0 0.0
    %1724 = vmatpush1.msra.mxu0 0.0
    %1725 = vmatprep.subr.mxu0 0.0
    %1726 = vmatpush1.msra.mxu0 0.0
    %1727 = vmatprep.subr.mxu0 0.0
    %1728 = vmatpush1.msra.mxu0 0.0
    %1729 = vmatprep.subr.mxu0 0.0
    %1730 = vmatpush1.msra.mxu0 0.0
    %1731 = vmatprep.subr.mxu0 0.0
    %1732 = vmatpush1.msra.mxu0 0.0
    %1733 = vmatprep.subr.mxu0 0.0
    %1734 = vmatpush1.msra.mxu0 0.0
    %1735 = vmatprep.subr.mxu0 0.0
    %1736 = vmatpush1.msra.mxu0 0.0
    %1737 = vmatprep.subr.mxu0 0.0
    %1738 = vmatpush1.msra.mxu0 0.0
    %1739 = vmatprep.subr.mxu0 0.0
    %1740 = vmatpush1.msra.mxu0 0.0
    %1741 = vmatprep.subr.mxu0 0.0
    %1742 = vmatpush1.msra.mxu0 0.0
    %1743 = vmatprep.subr.mxu0 0.0
    %1744 = vmatpush1.msra.mxu0 0.0
    %1745 = vmatprep.subr.mxu0 0.0
    %1746 = vmatpush1.msra.mxu0 0.0
    %1747 = vmatprep.subr.mxu0 0.0
    %1748 = vmatpush1.msra.mxu0 0.0
    %1749 = vmatprep.subr.mxu0 0.0
    %1750 = vmatpush1.msra.mxu0 0.0
    %1751 = vmatprep.subr.mxu0 0.0
    %1752 = vmatpush1.msra.mxu0 0.0
    %1753 = vmatprep.subr.mxu0 0.0
    %1754 = vmatpush1.msra.mxu0 0.0
    %1755 = vmatprep.subr.mxu0 0.0
    %1756 = vmatpush1.msra.mxu0 0.0
    %1757 = vmatprep.subr.mxu0 0.0
    %1758 = vmatpush1.msra.mxu0 0.0
    %1759 = vmatprep.subr.mxu0 0.0
    %1760 = vmatpush1.msra.mxu0 0.0
    %1761 = vmatprep.subr.mxu0 0.0
    %1762 = vmatpush1.msra.mxu0 0.0
    %1763 = vmatprep.subr.mxu0 0.0
    %1764 = vmatpush1.msra.mxu0 0.0
    %1765 = vmatprep.subr.mxu0 0.0
    %1766 = vmatpush1.msra.mxu0 0.0
    %1767 = vmatprep.subr.mxu0 0.0
    %1768 = vmatpush1.msra.mxu0 0.0
    %1769 = vmatprep.subr.mxu0 0.0
    %1770 = vmatpush1.msra.mxu0 0.0
    %1771 = vmatprep.subr.mxu0 0.0
    %1772 = vmatpush1.msra.mxu0 0.0
    %1773 = vmatprep.mubr.f32.mxu0 0.0
    %1774 = vmatmul.mubr.f32.gmra.mrb[0].mxu0 %v1707
    %v1775 = vpop.f32.mrb[0].mxu0
    %v1776 = vadd.f32 0.0, %v1775
    %v1777 = vpop.f32.mrb[0].mxu0
    %1778 = vdwg.mxu0
    %v1779 = vadd.f32 %v1454, %v1776
    %v1780 = vld [vmem:[%s1 + $0x5] ss:$0 sm:$0xff]
    %v1781 = vadd.f32 %v1779, %v1780
    %v1782 = vld [vmem:[#allocation2 + $0x630] sm:$0xff]
    %v1783 = vld [vmem:[#allocation2 + $0x640] sm:$0xff]
    %v1784 = vld [vmem:[#allocation2 + $0x650] sm:$0xff]
    %v1785 = vld [vmem:[#allocation2 + $0x660] sm:$0xff]
    %v1786 = vld [vmem:[%s1 + $0x7] ss:$0 sm:$0xff]
    %v1788 = vsel %vm893, %v1781, 0
    %1790 = vmatprep.subr.mxu0 0.0
    %1791 = vmatpush1.msra.mxu0 %v1782
    %1792 = vmatprep.subr.mxu0 0.0
    %1793 = vmatpush1.msra.mxu0 %v1783
    %1794 = vmatprep.subr.mxu0 0.0
    %1795 = vmatpush1.msra.mxu0 %v1784
    %1796 = vmatprep.subr.mxu0 0.0
    %1797 = vmatpush1.msra.mxu0 %v1785
    %1798 = vmatprep.subr.mxu0 0.0
    %1799 = vmatpush1.msra.mxu0 0.0
    %1800 = vmatprep.subr.mxu0 0.0
    %1801 = vmatpush1.msra.mxu0 0.0
    %1802 = vmatprep.subr.mxu0 0.0
    %1803 = vmatpush1.msra.mxu0 0.0
    %1804 = vmatprep.subr.mxu0 0.0
    %1805 = vmatpush1.msra.mxu0 0.0
    %1806 = vmatprep.subr.mxu0 0.0
    %1807 = vmatpush1.msra.mxu0 0.0
    %1808 = vmatprep.subr.mxu0 0.0
    %1809 = vmatpush1.msra.mxu0 0.0
    %1810 = vmatprep.subr.mxu0 0.0
    %1811 = vmatpush1.msra.mxu0 0.0
    %1812 = vmatprep.subr.mxu0 0.0
    %1813 = vmatpush1.msra.mxu0 0.0
    %1814 = vmatprep.subr.mxu0 0.0
    %1815 = vmatpush1.msra.mxu0 0.0
    %1816 = vmatprep.subr.mxu0 0.0
    %1817 = vmatpush1.msra.mxu0 0.0
    %1818 = vmatprep.subr.mxu0 0.0
    %1819 = vmatpush1.msra.mxu0 0.0
    %1820 = vmatprep.subr.mxu0 0.0
    %1821 = vmatpush1.msra.mxu0 0.0
    %1822 = vmatprep.subr.mxu0 0.0
    %1823 = vmatpush1.msra.mxu0 0.0
    %1824 = vmatprep.subr.mxu0 0.0
    %1825 = vmatpush1.msra.mxu0 0.0
    %1826 = vmatprep.subr.mxu0 0.0
    %1827 = vmatpush1.msra.mxu0 0.0
    %1828 = vmatprep.subr.mxu0 0.0
    %1829 = vmatpush1.msra.mxu0 0.0
    %1830 = vmatprep.subr.mxu0 0.0
    %1831 = vmatpush1.msra.mxu0 0.0
    %1832 = vmatprep.subr.mxu0 0.0
    %1833 = vmatpush1.msra.mxu0 0.0
    %1834 = vmatprep.subr.mxu0 0.0
    %1835 = vmatpush1.msra.mxu0 0.0
    %1836 = vmatprep.subr.mxu0 0.0
    %1837 = vmatpush1.msra.mxu0 0.0
    %1838 = vmatprep.subr.mxu0 0.0
    %1839 = vmatpush1.msra.mxu0 0.0
    %1840 = vmatprep.subr.mxu0 0.0
    %1841 = vmatpush1.msra.mxu0 0.0
    %1842 = vmatprep.subr.mxu0 0.0
    %1843 = vmatpush1.msra.mxu0 0.0
    %1844 = vmatprep.subr.mxu0 0.0
    %1845 = vmatpush1.msra.mxu0 0.0
    %1846 = vmatprep.subr.mxu0 0.0
    %1847 = vmatpush1.msra.mxu0 0.0
    %1848 = vmatprep.subr.mxu0 0.0
    %1849 = vmatpush1.msra.mxu0 0.0
    %1850 = vmatprep.subr.mxu0 0.0
    %1851 = vmatpush1.msra.mxu0 0.0
    %1852 = vmatprep.subr.mxu0 0.0
    %1853 = vmatpush1.msra.mxu0 0.0
    %1854 = vmatprep.mubr.f32.mxu0 0.0
    %1855 = vmatmul.mubr.f32.gmra.mrb[0].mxu0 %v1788
    %v1856 = vpop.f32.mrb[0].mxu0
    %v1857 = vadd.f32 %v1786, %v1856
    %v1858 = vpop.f32.mrb[0].mxu0
    %1859 = vdwg.mxu0
    %v1860 = vmax.f32 %v1857, 0.0
    %v1861 = vand.u32 2147483647, %v1857
    %v1862 = vsub.f32 0.0, %v1861
    %v1863 = vmul.f32 %v1862, 1.442695
    %v1864 = vpow.pop %v1863
    %v1865 = vadd.f32 %v1864, 1.0
    %v1866 = vlog2.pop %v1865
    %v1867 = vmul.f32 %v1866, 0.6931472
    %v1868 = vadd.f32 %v1860, %v1867
    %v1869 = vsub.f32 %v1868, 0.6931472
    %v1870 = vld [vmem:[#allocation2 + $0x670] sm:$0xff]
    %v1871 = vld [vmem:[#allocation2 + $0x680] sm:$0xff]
    %v1872 = vld [vmem:[%s1 + $0x10] ss:$0 sm:$0xff]
    %v1874 = vsel %vm520, %v1869, 0
    %1876 = vmatprep.subr.mxu0 0.0
    %1877 = vmatpush1.msra.mxu0 %v1870
    %1878 = vmatprep.subr.mxu0 0.0
    %1879 = vmatpush1.msra.mxu0 %v1871
    %1880 = vmatprep.subr.mxu0 0.0
    %1881 = vmatpush1.msra.mxu0 0.0
    %1882 = vmatprep.subr.mxu0 0.0
    %1883 = vmatpush1.msra.mxu0 0.0
    %1884 = vmatprep.subr.mxu0 0.0
    %1885 = vmatpush1.msra.mxu0 0.0
    %1886 = vmatprep.subr.mxu0 0.0
    %1887 = vmatpush1.msra.mxu0 0.0
    %1888 = vmatprep.subr.mxu0 0.0
    %1889 = vmatpush1.msra.mxu0 0.0
    %1890 = vmatprep.subr.mxu0 0.0
    %1891 = vmatpush1.msra.mxu0 0.0
    %1892 = vmatprep.subr.mxu0 0.0
    %1893 = vmatpush1.msra.mxu0 0.0
    %1894 = vmatprep.subr.mxu0 0.0
    %1895 = vmatpush1.msra.mxu0 0.0
    %1896 = vmatprep.subr.mxu0 0.0
    %1897 = vmatpush1.msra.mxu0 0.0
    %1898 = vmatprep.subr.mxu0 0.0
    %1899 = vmatpush1.msra.mxu0 0.0
    %1900 = vmatprep.subr.mxu0 0.0
    %1901 = vmatpush1.msra.mxu0 0.0
    %1902 = vmatprep.subr.mxu0 0.0
    %1903 = vmatpush1.msra.mxu0 0.0
    %1904 = vmatprep.subr.mxu0 0.0
    %1905 = vmatpush1.msra.mxu0 0.0
    %1906 = vmatprep.subr.mxu0 0.0
    %1907 = vmatpush1.msra.mxu0 0.0
    %1908 = vmatprep.subr.mxu0 0.0
    %1909 = vmatpush1.msra.mxu0 0.0
    %1910 = vmatprep.subr.mxu0 0.0
    %1911 = vmatpush1.msra.mxu0 0.0
    %1912 = vmatprep.subr.mxu0 0.0
    %1913 = vmatpush1.msra.mxu0 0.0
    %1914 = vmatprep.subr.mxu0 0.0
    %1915 = vmatpush1.msra.mxu0 0.0
    %1916 = vmatprep.subr.mxu0 0.0
    %1917 = vmatpush1.msra.mxu0 0.0
    %1918 = vmatprep.subr.mxu0 0.0
    %1919 = vmatpush1.msra.mxu0 0.0
    %1920 = vmatprep.subr.mxu0 0.0
    %1921 = vmatpush1.msra.mxu0 0.0
    %1922 = vmatprep.subr.mxu0 0.0
    %1923 = vmatpush1.msra.mxu0 0.0
    %1924 = vmatprep.subr.mxu0 0.0
    %1925 = vmatpush1.msra.mxu0 0.0
    %1926 = vmatprep.subr.mxu0 0.0
    %1927 = vmatpush1.msra.mxu0 0.0
    %1928 = vmatprep.subr.mxu0 0.0
    %1929 = vmatpush1.msra.mxu0 0.0
    %1930 = vmatprep.subr.mxu0 0.0
    %1931 = vmatpush1.msra.mxu0 0.0
    %1932 = vmatprep.subr.mxu0 0.0
    %1933 = vmatpush1.msra.mxu0 0.0
    %1934 = vmatprep.subr.mxu0 0.0
    %1935 = vmatpush1.msra.mxu0 0.0
    %1936 = vmatprep.subr.mxu0 0.0
    %1937 = vmatpush1.msra.mxu0 0.0
    %1938 = vmatprep.subr.mxu0 0.0
    %1939 = vmatpush1.msra.mxu0 0.0
    %1940 = vmatprep.mubr.f32.mxu0 0.0
    %1941 = vmatmul.mubr.f32.gmra.mrb[0].mxu0 %v1874
    %v1942 = vpop.f32.mrb[0].mxu0
    %v1943 = vadd.f32 %v1872, %v1942
    %v1944 = vpop.f32.mrb[0].mxu0
    %1945 = vdwg.mxu0
    %v1947 = vsel %vm175, %v82, 0
    %1949 = vmatprep.subr.mxu0 0.0
    %1950 = vmatpush1.msra.mxu0 %v1943
    %1951 = vmatprep.subr.mxu0 0.0
    %1952 = vmatpush1.msra.mxu0 0.0
    %1953 = vmatprep.subr.mxu0 0.0
    %1954 = vmatpush1.msra.mxu0 0.0
    %1955 = vmatprep.subr.mxu0 0.0
    %1956 = vmatpush1.msra.mxu0 0.0
    %1957 = vmatprep.subr.mxu0 0.0
    %1958 = vmatpush1.msra.mxu0 0.0
    %1959 = vmatprep.subr.mxu0 0.0
    %1960 = vmatpush1.msra.mxu0 0.0
    %1961 = vmatprep.subr.mxu0 0.0
    %1962 = vmatpush1.msra.mxu0 0.0
    %1963 = vmatprep.subr.mxu0 0.0
    %1964 = vmatpush1.msra.mxu0 0.0
    %1965 = vmatprep.subr.mxu0 0.0
    %1966 = vmatpush1.msra.mxu0 0.0
    %1967 = vmatprep.subr.mxu0 0.0
    %1968 = vmatpush1.msra.mxu0 0.0
    %1969 = vmatprep.subr.mxu0 0.0
    %1970 = vmatpush1.msra.mxu0 0.0
    %1971 = vmatprep.subr.mxu0 0.0
    %1972 = vmatpush1.msra.mxu0 0.0
    %1973 = vmatprep.subr.mxu0 0.0
    %1974 = vmatpush1.msra.mxu0 0.0
    %1975 = vmatprep.subr.mxu0 0.0
    %1976 = vmatpush1.msra.mxu0 0.0
    %1977 = vmatprep.subr.mxu0 0.0
    %1978 = vmatpush1.msra.mxu0 0.0
    %1979 = vmatprep.subr.mxu0 0.0
    %1980 = vmatpush1.msra.mxu0 0.0
    %1981 = vmatprep.subr.mxu0 0.0
    %1982 = vmatpush1.msra.mxu0 0.0
    %1983 = vmatprep.subr.mxu0 0.0
    %1984 = vmatpush1.msra.mxu0 0.0
    %1985 = vmatprep.subr.mxu0 0.0
    %1986 = vmatpush1.msra.mxu0 0.0
    %1987 = vmatprep.subr.mxu0 0.0
    %1988 = vmatpush1.msra.mxu0 0.0
    %1989 = vmatprep.subr.mxu0 0.0
    %1990 = vmatpush1.msra.mxu0 0.0
    %1991 = vmatprep.subr.mxu0 0.0
    %1992 = vmatpush1.msra.mxu0 0.0
    %1993 = vmatprep.subr.mxu0 0.0
    %1994 = vmatpush1.msra.mxu0 0.0
    %1995 = vmatprep.subr.mxu0 0.0
    %1996 = vmatpush1.msra.mxu0 0.0
    %1997 = vmatprep.subr.mxu0 0.0
    %1998 = vmatpush1.msra.mxu0 0.0
    %1999 = vmatprep.subr.mxu0 0.0
    %2000 = vmatpush1.msra.mxu0 0.0
    %2001 = vmatprep.subr.mxu0 0.0
    %2002 = vmatpush1.msra.mxu0 0.0
    %2003 = vmatprep.subr.mxu0 0.0
    %2004 = vmatpush1.msra.mxu0 0.0
    %2005 = vmatprep.subr.mxu0 0.0
    %2006 = vmatpush1.msra.mxu0 0.0
    %2007 = vmatprep.subr.mxu0 0.0
    %2008 = vmatpush1.msra.mxu0 0.0
    %2009 = vmatprep.subr.mxu0 0.0
    %2010 = vmatpush1.msra.mxu0 0.0
    %2011 = vmatprep.subr.mxu0 0.0
    %2012 = vmatpush1.msra.mxu0 0.0
    %2013 = vmatprep.mubr.f32.mxu0 0.0
    %2014 = vmatmul.mubr.f32.gmra.mrb[0].mxu0 %v1947
    %v2015 = vpop.f32.mrb[0].mxu0
    %v2016 = vadd.f32 0.0, %v2015
    %v2017 = vpop.f32.mrb[0].mxu0
    %2018 = vdwg.mxu0
    %2019 = vst [vmem:[%s4] sm:$0xff] %v2016
    // Predicated region
    $region22: #{schnet_forward.1} parent=1 // pred_check
      _
    $region23: #{schnet_forward.1} parent=1 // pred_check_branch
      %2021 = sbr.rel (0) target = $region25
    $region24: #{schnet_forward.1} parent=1 // pred_region
      _
    $region25: #{schnet_forward.1} parent=1 // pred_fallthru
      _
    // Predicated region
    $region26: #{schnet_forward.1} parent=1 // pred_check
      _
    $region27: #{schnet_forward.1} parent=1 // pred_check_branch
      %2023 = sbr.rel (0) target = $region29
    $region28: #{schnet_forward.1} parent=1 // pred_region
      _
    $region29: #{schnet_forward.1} parent=1 // pred_fallthru
      _
    %2024 = vsyncpa [#allocation3], 1

</llo_original>
